<compile_context>
chip_gen: v7x
topology: tpu7x:2x2x1
jax: 0.10.0
libtpu: 0.0.40
codegen_flags: <defaults>
</compile_context>

<pallas_src>
import jax
import jax.numpy as jnp
from jax.experimental import pallas as pl
from jax.experimental.pallas import tpu as pltpu

HW = 9                 # spatial size of input / conv output
K = 9                  # conv kernel size
PAD = 4                # conv padding
COUT = 16              # conv output channels
FLAT = COUT * HW * HW  # 1296  (fc1 input features)
HID = HW * HW          # 81    (fc1/fc2 output features)
NPAD = 128             # lane-aligned hidden width used inside the kernel
KIN = 128              # lane-aligned flattened-input width (81 -> 128)


# ------------------- fused conv+ReLU -> fc1 -> fc2 -> fc3 -------------------
def fused_forward_kernel(x_ref, a_ref, bc_ref, w1_ref, b1_ref, w2_ref, b2_ref,
                         w3_ref, b3_ref, o_ref):
    # x:  (N, 128)    flattened 9x9 input, lanes >=81 are zero
    # A:  (128, 1296) Toeplitz matrix of conv1 weights; bc: (1, 1296) conv bias
    # w1: (1296, 128); w2: (128, 128); w3: (1, 128); b3: (1, 1)
    x = x_ref[...]
    h0 = jnp.dot(x, a_ref[...],
                 preferred_element_type=jnp.float32) + bc_ref[...]
    h0 = jnp.maximum(h0, 0.0)                          # conv1 + bias + ReLU
    h1 = jnp.dot(h0, w1_ref[...],
                 preferred_element_type=jnp.float32) + b1_ref[...]   # fc1
    h2 = jnp.dot(h1, w2_ref[...],
                 preferred_element_type=jnp.float32) + b2_ref[...]   # fc2
    # fc3 (out_features == 1): lane-reduce on the XLU instead of a skinny MXU op
    o_ref[...] = jnp.sum(h2 * w3_ref[...], axis=-1, keepdims=True) + b3_ref[...]


def fused_forward(x_flat, kp):
    n = x_flat.shape[0]
    vmem = lambda: pl.BlockSpec(memory_space=pltpu.MemorySpace.VMEM)
    return pl.pallas_call(
        fused_forward_kernel,
        out_shape=jax.ShapeDtypeStruct((n, 1), jnp.float32),
        in_specs=[vmem() for _ in range(9)],
        out_specs=vmem(),
    )(x_flat, kp["A"], kp["bc"], kp["w1t"], kp["b1"], kp["w2t"], kp["b2"],
      kp["w3"], kp["b3"])


# ------------------------------ parameters ----------------------------------
def init_params(key):
    # PyTorch-layout parameters (what nn.Module stores).
    ks = jax.random.split(key, 8)

    def uinit(kk, shape, fan_in):
        bound = 1.0 / (fan_in ** 0.5)
        return jax.random.uniform(kk, shape, jnp.float32, -bound, bound)

    return {
        "conv_w": uinit(ks[0], (COUT, 1, K, K), K * K),
        "conv_b": uinit(ks[1], (COUT,), K * K),
        "fc1_w": uinit(ks[2], (HID, FLAT), FLAT),
        "fc1_b": uinit(ks[3], (HID,), FLAT),
        "fc2_w": uinit(ks[4], (HID, HID), HID),
        "fc2_b": uinit(ks[5], (HID,), HID),
        "fc3_w": uinit(ks[6], (1, HID), HID),
        "fc3_b": uinit(ks[7], (1,), HID),
    }


def prepare_params(p):
    # One-time layout transforms into what the kernel consumes.
    #
    # Conv -> Toeplitz matmul:
    #   conv_out[n, c, oh, ow] = sum_{ih,iw} x[n, ih, iw] * w[c, ih-oh+4, iw-ow+4]
    # so A[ih*9+iw, c*81 + oh*9+ow] = w[c, ih-oh+4, iw-ow+4]  (0 where tap OOB).
    w = p["conv_w"].reshape(COUT, K, K).astype(jnp.float32)
    idx = jnp.arange(HW)
    d = idx[:, None] - idx[None, :] + PAD                # d[i_in, i_out], tap idx
    valid_1d = (d >= 0) & (d < K)
    dc = jnp.clip(d, 0, K - 1)
    # a5[c, ih, iw, oh, ow] = w[c, d[ih,oh], d[iw,ow]]
    a5 = w[:, dc[:, None, :, None], dc[None, :, None, :]]          # (16,9,9,9,9)
    valid = valid_1d[:, None, :, None] & valid_1d[None, :, None, :]
    a5 = jnp.where(valid[None], a5, 0.0)
    a81 = a5.transpose(1, 2, 0, 3, 4).reshape(HW * HW, FLAT)       # (81, 1296)
    a = jnp.zeros((KIN, FLAT), jnp.float32).at[:HID, :].set(a81)   # pad K -> 128

    bc = jnp.repeat(p["conv_b"].astype(jnp.float32), HW * HW).reshape(1, FLAT)

    # FC weights: transposed to (K, N_out), zero-padded to 128 lanes.
    w1t = jnp.zeros((FLAT, NPAD), jnp.float32).at[:, :HID].set(p["fc1_w"].T)
    b1 = jnp.zeros((1, NPAD), jnp.float32).at[:, :HID].set(p["fc1_b"])
    w2t = jnp.zeros((NPAD, NPAD), jnp.float32).at[:HID, :HID].set(p["fc2_w"].T)
    b2 = jnp.zeros((1, NPAD), jnp.float32).at[:, :HID].set(p["fc2_b"])
    w3 = jnp.zeros((1, NPAD), jnp.float32).at[:, :HID].set(p["fc3_w"])
    b3 = p["fc3_b"].reshape(1, 1).astype(jnp.float32)
    return {"A": a, "bc": bc, "w1t": w1t, "b1": b1, "w2t": w2t, "b2": b2,
            "w3": w3, "b3": b3}


# -------------------------------- model -------------------------------------
def model_forward(kp, x):
    n = x.shape[0]
    # (N, 1, 9, 9) -> (N, 81) -> lane-pad to (N, 128); tiny, fused by XLA.
    x_flat = jnp.pad(x.reshape(n, HW * HW), ((0, 0), (0, KIN - HW * HW)))
    out = fused_forward(x_flat, kp)                  # (N, 1)
    return out.reshape(n, 1, 1)                      # matches .view(-1,1,1296) path


def reference(p, x):
    conv = jax.lax.conv_general_dilated(
        x, p["conv_w"], (1, 1), ((PAD, PAD), (PAD, PAD)),
        dimension_numbers=("NCHW", "OIHW", "NCHW"))
    h = jax.nn.relu(conv + p["conv_b"][None, :, None, None])
    h = h.reshape(x.shape[0], -1)
    h = h @ p["fc1_w"].T + p["fc1_b"]
    h = h @ p["fc2_w"].T + p["fc2_b"]
    h = h @ p["fc3_w"].T + p["fc3_b"]
    return h.reshape(x.shape[0], 1, 1)


if __name__ == "__main__":
    key = jax.random.PRNGKey(0)
    pkey, xkey = jax.random.split(key)
    params = init_params(pkey)
    kparams = prepare_params(params)   # one-time weight layout for the kernel
    # fc1's 9*9*16 input size forces 1x9x9 inputs.
    x = jax.random.normal(xkey, (2, 1, HW, HW), jnp.float32)

    out = jax.jit(model_forward)(kparams, x)
    out = jax.block_until_ready(out)

    assert out.shape == (2, 1, 1), out.shape
    ref = reference(params, x)
    assert jnp.allclose(out, ref, rtol=1e-3, atol=1e-3), \
        float(jnp.max(jnp.abs(out - ref)))
    print("KERNEL_OK")
</pallas_src>

<mosaic_0001>
module attributes {stable_mosaic.version = 11 : i64} {
  func.func @fused_forward_kernel(%arg0: memref<2x128xf32, #tpu.memory_space<vmem>>, %arg1: memref<128x1296xf32, #tpu.memory_space<vmem>>, %arg2: memref<1x1296xf32, #tpu.memory_space<vmem>>, %arg3: memref<1296x128xf32, #tpu.memory_space<vmem>>, %arg4: memref<1x128xf32, #tpu.memory_space<vmem>>, %arg5: memref<128x128xf32, #tpu.memory_space<vmem>>, %arg6: memref<1x128xf32, #tpu.memory_space<vmem>>, %arg7: memref<1x128xf32, #tpu.memory_space<vmem>>, %arg8: memref<1x1xf32, #tpu.memory_space<vmem>>, %arg9: memref<2x1xf32, #tpu.memory_space<vmem>>) attributes {dimension_semantics = [], scalar_prefetch = 0 : i64, scratch_operands = 0 : i64, tpu.core_type = #tpu.core_type<tc>} {
    %c0 = arith.constant 0 : index
    %c0_0 = arith.constant 0 : index
    %0 = vector.load %arg0[%c0, %c0_0] : memref<2x128xf32, #tpu.memory_space<vmem>>, vector<2x128xf32>
    %c0_1 = arith.constant 0 : index
    %c0_2 = arith.constant 0 : index
    %1 = vector.load %arg1[%c0_1, %c0_2] : memref<128x1296xf32, #tpu.memory_space<vmem>>, vector<128x1296xf32>
    %cst = arith.constant dense<0.000000e+00> : vector<2x1296xf32>
    %2 = tpu.matmul %0, %1, %cst {dimension_numbers = #tpu.dot_dimension_numbers<[1], [0], [0], [1], [0, 0, 1, 1], [], []>} : vector<2x128xf32>, vector<128x1296xf32>, vector<2x1296xf32> -> vector<2x1296xf32>
    %c0_3 = arith.constant 0 : index
    %c0_4 = arith.constant 0 : index
    %3 = vector.load %arg2[%c0_3, %c0_4] : memref<1x1296xf32, #tpu.memory_space<vmem>>, vector<1x1296xf32>
    %4 = vector.broadcast %3 : vector<1x1296xf32> to vector<2x1296xf32>
    %5 = arith.addf %2, %4 : vector<2x1296xf32>
    %cst_5 = arith.constant 0.000000e+00 : f32
    %6 = vector.broadcast %cst_5 : f32 to vector<2x1296xf32>
    %7 = arith.maximumf %5, %6 : vector<2x1296xf32>
    %c0_6 = arith.constant 0 : index
    %c0_7 = arith.constant 0 : index
    %8 = vector.load %arg3[%c0_6, %c0_7] : memref<1296x128xf32, #tpu.memory_space<vmem>>, vector<1296x128xf32>
    %cst_8 = arith.constant dense<0.000000e+00> : vector<2x128xf32>
    %9 = tpu.matmul %7, %8, %cst_8 {dimension_numbers = #tpu.dot_dimension_numbers<[1], [0], [0], [1], [0, 0, 1, 1], [], []>} : vector<2x1296xf32>, vector<1296x128xf32>, vector<2x128xf32> -> vector<2x128xf32>
    %c0_9 = arith.constant 0 : index
    %c0_10 = arith.constant 0 : index
    %10 = vector.load %arg4[%c0_9, %c0_10] : memref<1x128xf32, #tpu.memory_space<vmem>>, vector<1x128xf32>
    %11 = vector.broadcast %10 : vector<1x128xf32> to vector<2x128xf32>
    %12 = arith.addf %9, %11 : vector<2x128xf32>
    %c0_11 = arith.constant 0 : index
    %c0_12 = arith.constant 0 : index
    %13 = vector.load %arg5[%c0_11, %c0_12] : memref<128x128xf32, #tpu.memory_space<vmem>>, vector<128x128xf32>
    %cst_13 = arith.constant dense<0.000000e+00> : vector<2x128xf32>
    %14 = tpu.matmul %12, %13, %cst_13 {dimension_numbers = #tpu.dot_dimension_numbers<[1], [0], [0], [1], [0, 0, 1, 1], [], []>} : vector<2x128xf32>, vector<128x128xf32>, vector<2x128xf32> -> vector<2x128xf32>
    %c0_14 = arith.constant 0 : index
    %c0_15 = arith.constant 0 : index
    %15 = vector.load %arg6[%c0_14, %c0_15] : memref<1x128xf32, #tpu.memory_space<vmem>>, vector<1x128xf32>
    %16 = vector.broadcast %15 : vector<1x128xf32> to vector<2x128xf32>
    %17 = arith.addf %14, %16 : vector<2x128xf32>
    %c0_16 = arith.constant 0 : index
    %c0_17 = arith.constant 0 : index
    %18 = vector.load %arg7[%c0_16, %c0_17] : memref<1x128xf32, #tpu.memory_space<vmem>>, vector<1x128xf32>
    %19 = vector.broadcast %18 : vector<1x128xf32> to vector<2x128xf32>
    %20 = arith.mulf %17, %19 : vector<2x128xf32>
    %cst_18 = arith.constant dense<0.000000e+00> : vector<2xf32>
    %21 = vector.multi_reduction <add>, %20, %cst_18 [1] : vector<2x128xf32> to vector<2xf32>
    %22 = vector.shape_cast %21 : vector<2xf32> to vector<2x1xf32>
    %c0_19 = arith.constant 0 : index
    %c0_20 = arith.constant 0 : index
    %23 = vector.load %arg8[%c0_19, %c0_20] : memref<1x1xf32, #tpu.memory_space<vmem>>, vector<1x1xf32>
    %24 = vector.broadcast %23 : vector<1x1xf32> to vector<2x1xf32>
    %25 = arith.addf %22, %24 : vector<2x1xf32>
    %c0_21 = arith.constant 0 : index
    %c0_22 = arith.constant 0 : index
    %26 = vector.load %arg9[%c0_21, %c0_22] : memref<2x1xf32, #tpu.memory_space<vmem>>, vector<2x1xf32>
    tpu.vector_store %arg9[%c0_21, %c0_22], %25 {strides = array<i32>} : memref<2x1xf32, #tpu.memory_space<vmem>>, vector<2x1xf32>,
    return
  }
}

</mosaic_0001>

<llo_original>
// kernel: model_forward.1
$region0: #{model_forward.1}
  #allocation0 [shape = 'u32[]', space=smem, size = 0x4, offset = 0x4, fixed_abs, tag = 'smem constant byte address 0x4 - core index']
  #allocation1 [shape = 'u32[144,128]{1,0:T(1,128)}', space=vmem, size = 0x12000, scoped, tag = 'internal scratch']
  #allocation2 [shape = 'f32[1,1]{1,0:T(1,128)S(1)}', space=vmem, size = 0x200, scoped, tag = 'scoped memory for model_forward.1']
  %s0 = inlined_call_operand.vmem [shape: f32[2,128], index: 0, kind: input, shape index: {}]
  %s1 = inlined_call_operand.vmem [shape: f32[128,1296], index: 1, kind: input, shape index: {}]
  %s2 = inlined_call_operand.vmem [shape: f32[1,1296], index: 2, kind: input, shape index: {}]
  %s3 = inlined_call_operand.vmem [shape: f32[1296,128], index: 3, kind: input, shape index: {}]
  %s4 = inlined_call_operand.vmem [shape: f32[1,128], index: 4, kind: input, shape index: {}]
  %s5 = inlined_call_operand.vmem [shape: f32[128,128], index: 5, kind: input, shape index: {}]
  %s6 = inlined_call_operand.vmem [shape: f32[1,128], index: 6, kind: input, shape index: {}]
  %s7 = inlined_call_operand.vmem [shape: f32[1,128], index: 7, kind: input, shape index: {}]
  %s8 = inlined_call_operand.<no memory space> [shape: f32[1,1], index: 8, kind: input, shape index: {}]
  %s9 = inlined_call_operand.vmem [shape: f32[2,1], index: 9, kind: output, shape index: {}]
  %s10 = sld [smem:[#allocation0]]
  $region46: #{model_forward.1} parent=0
    _
  %s12 = ssub.s32 1, %s10
  %s13 = scalar_select 0, %s12, %s10
  %v14 = vstv %s8
  %15 = vst [vmem:[#allocation2] sm:$0x1] %v14
  // Predicated region
  $region2: #{model_forward.1} parent=0 // pred_check
    _
  $region3: #{model_forward.1} parent=0 // pred_check_branch
    %17 = sbr.rel (0) target = $region5
  $region4: #{model_forward.1} parent=0 // pred_region
    _
  $region5: #{model_forward.1} parent=0 // pred_fallthru
    _
  // Predicated region
  $region6: #{model_forward.1} parent=0 // pred_check
    _
  $region7: #{model_forward.1} parent=0 // pred_check_branch
    %19 = sbr.rel (0) target = $region9
  $region8: #{model_forward.1} parent=0 // pred_region
    _
  $region9: #{model_forward.1} parent=0 // pred_fallthru
    _
  // Predicated region
  $region10: #{model_forward.1} parent=0 // pred_check
    _
  $region11: #{model_forward.1} parent=0 // pred_check_branch
    %21 = sbr.rel (0) target = $region13
  $region12: #{model_forward.1} parent=0 // pred_region
    _
  $region13: #{model_forward.1} parent=0 // pred_fallthru
    _
  // Predicated region
  $region14: #{model_forward.1} parent=0 // pred_check
    _
  $region15: #{model_forward.1} parent=0 // pred_check_branch
    %23 = sbr.rel (0) target = $region17
  $region16: #{model_forward.1} parent=0 // pred_region
    _
  $region17: #{model_forward.1} parent=0 // pred_fallthru
    _
  // Predicated region
  $region18: #{model_forward.1} parent=0 // pred_check
    _
  $region19: #{model_forward.1} parent=0 // pred_check_branch
    %25 = sbr.rel (0) target = $region21
  $region20: #{model_forward.1} parent=0 // pred_region
    _
  $region21: #{model_forward.1} parent=0 // pred_fallthru
    _
  // Predicated region
  $region22: #{model_forward.1} parent=0 // pred_check
    _
  $region23: #{model_forward.1} parent=0 // pred_check_branch
    %27 = sbr.rel (0) target = $region25
  $region24: #{model_forward.1} parent=0 // pred_region
    _
  $region25: #{model_forward.1} parent=0 // pred_fallthru
    _
  // Predicated region
  $region26: #{model_forward.1} parent=0 // pred_check
    _
  $region27: #{model_forward.1} parent=0 // pred_check_branch
    %29 = sbr.rel (0) target = $region29
  $region28: #{model_forward.1} parent=0 // pred_region
    _
  $region29: #{model_forward.1} parent=0 // pred_fallthru
    _
  // Predicated region
  $region30: #{model_forward.1} parent=0 // pred_check
    _
  $region31: #{model_forward.1} parent=0 // pred_check_branch
    %31 = sbr.rel (0) target = $region33
  $region32: #{model_forward.1} parent=0 // pred_region
    _
  $region33: #{model_forward.1} parent=0 // pred_fallthru
    _
  // Predicated region
  $region34: #{model_forward.1} parent=0 // pred_check
    _
  $region35: #{model_forward.1} parent=0 // pred_check_branch
    %33 = sbr.rel (0) target = $region37
  $region36: #{model_forward.1} parent=0 // pred_region
    _
  $region37: #{model_forward.1} parent=0 // pred_fallthru
    _
  %v34 = vld [vmem:[%s0] sm:$0x3]
  %v35 = vld [vmem:[%s1] sm:$0xff]
  %v36 = vld [vmem:[%s1 + $0x8] sm:$0xff]
  %v37 = vld [vmem:[%s1 + $0x10] sm:$0xff]
  %v38 = vld [vmem:[%s1 + $0x18] sm:$0xff]
  %v39 = vld [vmem:[%s1 + $0x20] sm:$0xff]
  %v40 = vld [vmem:[%s1 + $0x28] sm:$0xff]
  %v41 = vld [vmem:[%s1 + $0x30] sm:$0xff]
  %v42 = vld [vmem:[%s1 + $0x38] sm:$0xff]
  %v43 = vld [vmem:[%s1 + $0x40] sm:$0xff]
  %v44 = vld [vmem:[%s1 + $0x48] sm:$0xff]
  %v45 = vld [vmem:[%s1 + $0x50] sm:$0xff]
  %v46 = vld [vmem:[%s1 + $0x58] sm:$0xff]
  %v47 = vld [vmem:[%s1 + $0x60] sm:$0xff]
  %v48 = vld [vmem:[%s1 + $0x68] sm:$0xff]
  %v49 = vld [vmem:[%s1 + $0x70] sm:$0xff]
  %v50 = vld [vmem:[%s1 + $0x78] sm:$0xff]
  %v51 = vld [vmem:[%s1 + $0x80] sm:$0xff]
  %v52 = vld [vmem:[%s1 + $0x88] sm:$0xff]
  %v53 = vld [vmem:[%s1 + $0x90] sm:$0xff]
  %v54 = vld [vmem:[%s1 + $0x98] sm:$0xff]
  %v55 = vld [vmem:[%s1 + $0xa0] sm:$0xff]
  %v56 = vld [vmem:[%s1 + $0xa8] sm:$0xff]
  %v57 = vld [vmem:[%s1 + $0xb0] sm:$0xff]
  %v58 = vld [vmem:[%s1 + $0xb8] sm:$0xff]
  %v59 = vld [vmem:[%s1 + $0xc0] sm:$0xff]
  %v60 = vld [vmem:[%s1 + $0xc8] sm:$0xff]
  %v61 = vld [vmem:[%s1 + $0xd0] sm:$0xff]
  %v62 = vld [vmem:[%s1 + $0xd8] sm:$0xff]
  %v63 = vld [vmem:[%s1 + $0xe0] sm:$0xff]
  %v64 = vld [vmem:[%s1 + $0xe8] sm:$0xff]
  %v65 = vld [vmem:[%s1 + $0xf0] sm:$0xff]
  %v66 = vld [vmem:[%s1 + $0xf8] sm:$0xff]
  %v67 = vld [vmem:[%s1 + $0x100] sm:$0xff]
  %v68 = vld [vmem:[%s1 + $0x108] sm:$0xff]
  %v69 = vld [vmem:[%s1 + $0x110] sm:$0xff]
  %v70 = vld [vmem:[%s1 + $0x118] sm:$0xff]
  %v71 = vld [vmem:[%s1 + $0x120] sm:$0xff]
  %v72 = vld [vmem:[%s1 + $0x128] sm:$0xff]
  %v73 = vld [vmem:[%s1 + $0x130] sm:$0xff]
  %v74 = vld [vmem:[%s1 + $0x138] sm:$0xff]
  %v75 = vld [vmem:[%s1 + $0x140] sm:$0xff]
  %v76 = vld [vmem:[%s1 + $0x148] sm:$0xff]
  %v77 = vld [vmem:[%s1 + $0x150] sm:$0xff]
  %v78 = vld [vmem:[%s1 + $0x158] sm:$0xff]
  %v79 = vld [vmem:[%s1 + $0x160] sm:$0xff]
  %v80 = vld [vmem:[%s1 + $0x168] sm:$0xff]
  %v81 = vld [vmem:[%s1 + $0x170] sm:$0xff]
  %v82 = vld [vmem:[%s1 + $0x178] sm:$0xff]
  %v83 = vld [vmem:[%s1 + $0x180] sm:$0xff]
  %v84 = vld [vmem:[%s1 + $0x188] sm:$0xff]
  %v85 = vld [vmem:[%s1 + $0x190] sm:$0xff]
  %v86 = vld [vmem:[%s1 + $0x198] sm:$0xff]
  %v87 = vld [vmem:[%s1 + $0x1a0] sm:$0xff]
  %v88 = vld [vmem:[%s1 + $0x1a8] sm:$0xff]
  %v89 = vld [vmem:[%s1 + $0x1b0] sm:$0xff]
  %v90 = vld [vmem:[%s1 + $0x1b8] sm:$0xff]
  %v91 = vld [vmem:[%s1 + $0x1c0] sm:$0xff]
  %v92 = vld [vmem:[%s1 + $0x1c8] sm:$0xff]
  %v93 = vld [vmem:[%s1 + $0x1d0] sm:$0xff]
  %v94 = vld [vmem:[%s1 + $0x1d8] sm:$0xff]
  %v95 = vld [vmem:[%s1 + $0x1e0] sm:$0xff]
  %v96 = vld [vmem:[%s1 + $0x1e8] sm:$0xff]
  %v97 = vld [vmem:[%s1 + $0x1f0] sm:$0xff]
  %v98 = vld [vmem:[%s1 + $0x1f8] sm:$0xff]
  %v99 = vld [vmem:[%s1 + $0x200] sm:$0xff]
  %v100 = vld [vmem:[%s1 + $0x208] sm:$0xff]
  %v101 = vld [vmem:[%s1 + $0x210] sm:$0xff]
  %v102 = vld [vmem:[%s1 + $0x218] sm:$0xff]
  %v103 = vld [vmem:[%s1 + $0x220] sm:$0xff]
  %v104 = vld [vmem:[%s1 + $0x228] sm:$0xff]
  %v105 = vld [vmem:[%s1 + $0x230] sm:$0xff]
  %v106 = vld [vmem:[%s1 + $0x238] sm:$0xff]
  %v107 = vld [vmem:[%s1 + $0x240] sm:$0xff]
  %v108 = vld [vmem:[%s1 + $0x248] sm:$0xff]
  %v109 = vld [vmem:[%s1 + $0x250] sm:$0xff]
  %v110 = vld [vmem:[%s1 + $0x258] sm:$0xff]
  %v111 = vld [vmem:[%s1 + $0x260] sm:$0xff]
  %v112 = vld [vmem:[%s1 + $0x268] sm:$0xff]
  %v113 = vld [vmem:[%s1 + $0x270] sm:$0xff]
  %v114 = vld [vmem:[%s1 + $0x278] sm:$0xff]
  %v115 = vld [vmem:[%s1 + $0x280] sm:$0xff]
  %v116 = vld [vmem:[%s1 + $0x288] sm:$0xff]
  %v117 = vld [vmem:[%s1 + $0x290] sm:$0xff]
  %v118 = vld [vmem:[%s1 + $0x298] sm:$0xff]
  %v119 = vld [vmem:[%s1 + $0x2a0] sm:$0xff]
  %v120 = vld [vmem:[%s1 + $0x2a8] sm:$0xff]
  %v121 = vld [vmem:[%s1 + $0x2b0] sm:$0xff]
  %v122 = vld [vmem:[%s1 + $0x2b8] sm:$0xff]
  %v123 = vld [vmem:[%s1 + $0x2c0] sm:$0xff]
  %v124 = vld [vmem:[%s1 + $0x2c8] sm:$0xff]
  %v125 = vld [vmem:[%s1 + $0x2d0] sm:$0xff]
  %v126 = vld [vmem:[%s1 + $0x2d8] sm:$0xff]
  %v127 = vld [vmem:[%s1 + $0x2e0] sm:$0xff]
  %v128 = vld [vmem:[%s1 + $0x2e8] sm:$0xff]
  %v129 = vld [vmem:[%s1 + $0x2f0] sm:$0xff]
  %v130 = vld [vmem:[%s1 + $0x2f8] sm:$0xff]
  %v131 = vld [vmem:[%s1 + $0x300] sm:$0xff]
  %v132 = vld [vmem:[%s1 + $0x308] sm:$0xff]
  %v133 = vld [vmem:[%s1 + $0x310] sm:$0xff]
  %v134 = vld [vmem:[%s1 + $0x318] sm:$0xff]
  %v135 = vld [vmem:[%s1 + $0x320] sm:$0xff]
  %v136 = vld [vmem:[%s1 + $0x328] sm:$0xff]
  %v137 = vld [vmem:[%s1 + $0x330] sm:$0xff]
  %v138 = vld [vmem:[%s1 + $0x338] sm:$0xff]
  %v139 = vld [vmem:[%s1 + $0x340] sm:$0xff]
  %v140 = vld [vmem:[%s1 + $0x348] sm:$0xff]
  %v141 = vld [vmem:[%s1 + $0x350] sm:$0xff]
  %v142 = vld [vmem:[%s1 + $0x358] sm:$0xff]
  %v143 = vld [vmem:[%s1 + $0x360] sm:$0xff]
  %v144 = vld [vmem:[%s1 + $0x368] sm:$0xff]
  %v145 = vld [vmem:[%s1 + $0x370] sm:$0xff]
  %v146 = vld [vmem:[%s1 + $0x378] sm:$0xff]
  %v147 = vld [vmem:[%s1 + $0x380] sm:$0xff]
  %v148 = vld [vmem:[%s1 + $0x388] sm:$0xff]
  %v149 = vld [vmem:[%s1 + $0x390] sm:$0xff]
  %v150 = vld [vmem:[%s1 + $0x398] sm:$0xff]
  %v151 = vld [vmem:[%s1 + $0x3a0] sm:$0xff]
  %v152 = vld [vmem:[%s1 + $0x3a8] sm:$0xff]
  %v153 = vld [vmem:[%s1 + $0x3b0] sm:$0xff]
  %v154 = vld [vmem:[%s1 + $0x3b8] sm:$0xff]
  %v155 = vld [vmem:[%s1 + $0x3c0] sm:$0xff]
  %v156 = vld [vmem:[%s1 + $0x3c8] sm:$0xff]
  %v157 = vld [vmem:[%s1 + $0x3d0] sm:$0xff]
  %v158 = vld [vmem:[%s1 + $0x3d8] sm:$0xff]
  %v159 = vld [vmem:[%s1 + $0x3e0] sm:$0xff]
  %v160 = vld [vmem:[%s1 + $0x3e8] sm:$0xff]
  %v161 = vld [vmem:[%s1 + $0x3f0] sm:$0xff]
  %v162 = vld [vmem:[%s1 + $0x3f8] sm:$0xff]
  %v163 = vld [vmem:[%s1 + $0x400] sm:$0xff]
  %v164 = vld [vmem:[%s1 + $0x408] sm:$0xff]
  %v165 = vld [vmem:[%s1 + $0x410] sm:$0xff]
  %v166 = vld [vmem:[%s1 + $0x418] sm:$0xff]
  %v167 = vld [vmem:[%s1 + $0x420] sm:$0xff]
  %v168 = vld [vmem:[%s1 + $0x428] sm:$0xff]
  %v169 = vld [vmem:[%s1 + $0x430] sm:$0xff]
  %v170 = vld [vmem:[%s1 + $0x438] sm:$0xff]
  %v171 = vld [vmem:[%s1 + $0x440] sm:$0xff]
  %v172 = vld [vmem:[%s1 + $0x448] sm:$0xff]
  %v173 = vld [vmem:[%s1 + $0x450] sm:$0xff]
  %v174 = vld [vmem:[%s1 + $0x458] sm:$0xff]
  %v175 = vld [vmem:[%s1 + $0x460] sm:$0xff]
  %v176 = vld [vmem:[%s1 + $0x468] sm:$0xff]
  %v177 = vld [vmem:[%s1 + $0x470] sm:$0xff]
  %v178 = vld [vmem:[%s1 + $0x478] sm:$0xff]
  %v179 = vld [vmem:[%s1 + $0x480] sm:$0xff]
  %v180 = vld [vmem:[%s1 + $0x488] sm:$0xff]
  %v181 = vld [vmem:[%s1 + $0x490] sm:$0xff]
  %v182 = vld [vmem:[%s1 + $0x498] sm:$0xff]
  %v183 = vld [vmem:[%s1 + $0x4a0] sm:$0xff]
  %v184 = vld [vmem:[%s1 + $0x4a8] sm:$0xff]
  %v185 = vld [vmem:[%s1 + $0x4b0] sm:$0xff]
  %v186 = vld [vmem:[%s1 + $0x4b8] sm:$0xff]
  %v187 = vld [vmem:[%s1 + $0x4c0] sm:$0xff]
  %v188 = vld [vmem:[%s1 + $0x4c8] sm:$0xff]
  %v189 = vld [vmem:[%s1 + $0x4d0] sm:$0xff]
  %v190 = vld [vmem:[%s1 + $0x4d8] sm:$0xff]
  %v191 = vld [vmem:[%s1 + $0x4e0] sm:$0xff]
  %v192 = vld [vmem:[%s1 + $0x4e8] sm:$0xff]
  %v193 = vld [vmem:[%s1 + $0x4f0] sm:$0xff]
  %v194 = vld [vmem:[%s1 + $0x4f8] sm:$0xff]
  %v195 = vld [vmem:[%s1 + $0x500] sm:$0xff]
  %v196 = vld [vmem:[%s1 + $0x508] sm:$0xff]
  %v197 = vld [vmem:[%s1 + $0x510] sm:$0xff]
  %v198 = vld [vmem:[%s1 + $0x518] sm:$0xff]
  %v199 = vld [vmem:[%s1 + $0x520] sm:$0xff]
  %v200 = vld [vmem:[%s1 + $0x528] sm:$0xff]
  %v201 = vld [vmem:[%s1 + $0x530] sm:$0xff]
  %v202 = vld [vmem:[%s1 + $0x538] sm:$0xff]
  %v203 = vld [vmem:[%s1 + $0x540] sm:$0xff]
  %v204 = vld [vmem:[%s1 + $0x548] sm:$0xff]
  %v205 = vld [vmem:[%s1 + $0x550] sm:$0xff]
  %v206 = vld [vmem:[%s1 + $0x558] sm:$0xff]
  %v207 = vld [vmem:[%s1 + $0x560] sm:$0xff]
  %v208 = vld [vmem:[%s1 + $0x568] sm:$0xff]
  %v209 = vld [vmem:[%s1 + $0x570] sm:$0xff]
  %v210 = vld [vmem:[%s1 + $0x578] sm:$0xff]
  %v211 = vld [vmem:[%s2] sm:$0xff]
  %v212 = vld [vmem:[%s2 + $0x8] sm:$0x7]
  %v215 = vlaneseq
  %v216 = vshrl.u32 %v215, 7
  %v217 = vsub.s32 0, %v216
  %v218 = vrot.slane %v211, %v217
  %v219 = vlaneseq
  %v220 = vshrl.u32 %v219, 7
  %v221 = vsub.s32 1, %v220
  %v222 = vrot.slane %v211, %v221
  %v223 = vlaneseq
  %v224 = vshrl.u32 %v223, 7
  %v225 = vsub.s32 2, %v224
  %v226 = vrot.slane %v211, %v225
  %v227 = vlaneseq
  %v228 = vshrl.u32 %v227, 7
  %v229 = vsub.s32 3, %v228
  %v230 = vrot.slane %v211, %v229
  %v231 = vlaneseq
  %v232 = vshrl.u32 %v231, 7
  %v233 = vsub.s32 4, %v232
  %v234 = vrot.slane %v211, %v233
  %v235 = vlaneseq
  %v236 = vshrl.u32 %v235, 7
  %v237 = vsub.s32 5, %v236
  %v238 = vrot.slane %v211, %v237
  %v239 = vlaneseq
  %v240 = vshrl.u32 %v239, 7
  %v241 = vsub.s32 6, %v240
  %v242 = vrot.slane %v211, %v241
  %v243 = vlaneseq
  %v244 = vshrl.u32 %v243, 7
  %v245 = vsub.s32 7, %v244
  %v246 = vrot.slane %v211, %v245
  %v247 = vlaneseq
  %v248 = vshrl.u32 %v247, 7
  %v249 = vsub.s32 0, %v248
  %v250 = vrot.slane %v212, %v249
  %v251 = vlaneseq
  %v252 = vshrl.u32 %v251, 7
  %v253 = vsub.s32 1, %v252
  %v254 = vrot.slane %v212, %v253
  %v255 = vlaneseq
  %v256 = vshrl.u32 %v255, 7
  %v257 = vsub.s32 2, %v256
  %v258 = vrot.slane %v212, %v257
  %270 = vmatprep.subr.mxu0 %v36
  %271 = vmatpush1.msra.mxu0 %v35
  %272 = vmatprep.subr.mxu0 %v47
  %273 = vmatpush1.msra.mxu0 %v46
  %274 = vmatprep.subr.mxu0 %v58
  %275 = vmatpush1.msra.mxu0 %v57
  %276 = vmatprep.subr.mxu0 %v69
  %277 = vmatpush1.msra.mxu0 %v68
  %278 = vmatprep.subr.mxu0 %v80
  %279 = vmatpush1.msra.mxu0 %v79
  %280 = vmatprep.subr.mxu0 %v91
  %281 = vmatpush1.msra.mxu0 %v90
  %282 = vmatprep.subr.mxu0 %v102
  %283 = vmatpush1.msra.mxu0 %v101
  %284 = vmatprep.subr.mxu0 %v113
  %285 = vmatpush1.msra.mxu0 %v112
  %286 = vmatprep.subr.mxu0 %v124
  %287 = vmatpush1.msra.mxu0 %v123
  %288 = vmatprep.subr.mxu0 %v135
  %289 = vmatpush1.msra.mxu0 %v134
  %290 = vmatprep.subr.mxu0 %v146
  %291 = vmatpush1.msra.mxu0 %v145
  %292 = vmatprep.subr.mxu0 %v157
  %293 = vmatpush1.msra.mxu0 %v156
  %294 = vmatprep.subr.mxu0 %v168
  %295 = vmatpush1.msra.mxu0 %v167
  %296 = vmatprep.subr.mxu0 %v179
  %297 = vmatpush1.msra.mxu0 %v178
  %298 = vmatprep.subr.mxu0 %v190
  %299 = vmatpush1.msra.mxu0 %v189
  %300 = vmatprep.subr.mxu0 %v201
  %301 = vmatpush1.msra.mxu0 %v200
  %302 = vmatprep.subr.mxu0 0.0
  %303 = vmatpush1.msra.mxu0 0.0
  %304 = vmatprep.subr.mxu0 0.0
  %305 = vmatpush1.msra.mxu0 0.0
  %306 = vmatprep.subr.mxu0 0.0
  %307 = vmatpush1.msra.mxu0 0.0
  %308 = vmatprep.subr.mxu0 0.0
  %309 = vmatpush1.msra.mxu0 0.0
  %310 = vmatprep.subr.mxu0 0.0
  %311 = vmatpush1.msra.mxu0 0.0
  %312 = vmatprep.subr.mxu0 0.0
  %313 = vmatpush1.msra.mxu0 0.0
  %314 = vmatprep.subr.mxu0 0.0
  %315 = vmatpush1.msra.mxu0 0.0
  %316 = vmatprep.subr.mxu0 0.0
  %317 = vmatpush1.msra.mxu0 0.0
  %318 = vmatprep.subr.mxu0 0.0
  %319 = vmatpush1.msra.mxu0 0.0
  %320 = vmatprep.subr.mxu0 0.0
  %321 = vmatpush1.msra.mxu0 0.0
  %322 = vmatprep.subr.mxu0 0.0
  %323 = vmatpush1.msra.mxu0 0.0
  %324 = vmatprep.subr.mxu0 0.0
  %325 = vmatpush1.msra.mxu0 0.0
  %326 = vmatprep.subr.mxu0 0.0
  %327 = vmatpush1.msra.mxu0 0.0
  %328 = vmatprep.subr.mxu0 0.0
  %329 = vmatpush1.msra.mxu0 0.0
  %330 = vmatprep.subr.mxu0 0.0
  %331 = vmatpush1.msra.mxu0 0.0
  %332 = vmatprep.subr.mxu0 0.0
  %333 = vmatpush1.msra.mxu0 0.0
  %334 = vmatprep.mubr.f32.mxu0 0.0
  %335 = vmatmul.mubr.f32.gmra.mrb[0].mxu0 %v34
  %v336 = vpop.f32.mrb[0].mxu0
  %v337 = vadd.f32 %v218, %v336
  %v338 = vpop.f32.mrb[0].mxu0
  %v339 = vadd.f32 %v222, %v338
  %340 = vdwg.mxu0
  %341 = vmatprep.subr.mxu0 %v38
  %342 = vmatpush1.msra.mxu0 %v37
  %343 = vmatprep.subr.mxu0 %v49
  %344 = vmatpush1.msra.mxu0 %v48
  %345 = vmatprep.subr.mxu0 %v60
  %346 = vmatpush1.msra.mxu0 %v59
  %347 = vmatprep.subr.mxu0 %v71
  %348 = vmatpush1.msra.mxu0 %v70
  %349 = vmatprep.subr.mxu0 %v82
  %350 = vmatpush1.msra.mxu0 %v81
  %351 = vmatprep.subr.mxu0 %v93
  %352 = vmatpush1.msra.mxu0 %v92
  %353 = vmatprep.subr.mxu0 %v104
  %354 = vmatpush1.msra.mxu0 %v103
  %355 = vmatprep.subr.mxu0 %v115
  %356 = vmatpush1.msra.mxu0 %v114
  %357 = vmatprep.subr.mxu0 %v126
  %358 = vmatpush1.msra.mxu0 %v125
  %359 = vmatprep.subr.mxu0 %v137
  %360 = vmatpush1.msra.mxu0 %v136
  %361 = vmatprep.subr.mxu0 %v148
  %362 = vmatpush1.msra.mxu0 %v147
  %363 = vmatprep.subr.mxu0 %v159
  %364 = vmatpush1.msra.mxu0 %v158
  %365 = vmatprep.subr.mxu0 %v170
  %366 = vmatpush1.msra.mxu0 %v169
  %367 = vmatprep.subr.mxu0 %v181
  %368 = vmatpush1.msra.mxu0 %v180
  %369 = vmatprep.subr.mxu0 %v192
  %370 = vmatpush1.msra.mxu0 %v191
  %371 = vmatprep.subr.mxu0 %v203
  %372 = vmatpush1.msra.mxu0 %v202
  %373 = vmatprep.subr.mxu0 0.0
  %374 = vmatpush1.msra.mxu0 0.0
  %375 = vmatprep.subr.mxu0 0.0
  %376 = vmatpush1.msra.mxu0 0.0
  %377 = vmatprep.subr.mxu0 0.0
  %378 = vmatpush1.msra.mxu0 0.0
  %379 = vmatprep.subr.mxu0 0.0
  %380 = vmatpush1.msra.mxu0 0.0
  %381 = vmatprep.subr.mxu0 0.0
  %382 = vmatpush1.msra.mxu0 0.0
  %383 = vmatprep.subr.mxu0 0.0
  %384 = vmatpush1.msra.mxu0 0.0
  %385 = vmatprep.subr.mxu0 0.0
  %386 = vmatpush1.msra.mxu0 0.0
  %387 = vmatprep.subr.mxu0 0.0
  %388 = vmatpush1.msra.mxu0 0.0
  %389 = vmatprep.subr.mxu0 0.0
  %390 = vmatpush1.msra.mxu0 0.0
  %391 = vmatprep.subr.mxu0 0.0
  %392 = vmatpush1.msra.mxu0 0.0
  %393 = vmatprep.subr.mxu0 0.0
  %394 = vmatpush1.msra.mxu0 0.0
  %395 = vmatprep.subr.mxu0 0.0
  %396 = vmatpush1.msra.mxu0 0.0
  %397 = vmatprep.subr.mxu0 0.0
  %398 = vmatpush1.msra.mxu0 0.0
  %399 = vmatprep.subr.mxu0 0.0
  %400 = vmatpush1.msra.mxu0 0.0
  %401 = vmatprep.subr.mxu0 0.0
  %402 = vmatpush1.msra.mxu0 0.0
  %403 = vmatprep.subr.mxu0 0.0
  %404 = vmatpush1.msra.mxu0 0.0
  %405 = vmatprep.mubr.f32.mxu0 0.0
  %406 = vmatmul.mubr.f32.gmra.mrb[0].mxu0 %v34
  %v407 = vpop.f32.mrb[0].mxu0
  %v408 = vadd.f32 %v226, %v407
  %v409 = vpop.f32.mrb[0].mxu0
  %v410 = vadd.f32 %v230, %v409
  %411 = vdwg.mxu0
  %412 = vmatprep.subr.mxu0 %v40
  %413 = vmatpush1.msra.mxu0 %v39
  %414 = vmatprep.subr.mxu0 %v51
  %415 = vmatpush1.msra.mxu0 %v50
  %416 = vmatprep.subr.mxu0 %v62
  %417 = vmatpush1.msra.mxu0 %v61
  %418 = vmatprep.subr.mxu0 %v73
  %419 = vmatpush1.msra.mxu0 %v72
  %420 = vmatprep.subr.mxu0 %v84
  %421 = vmatpush1.msra.mxu0 %v83
  %422 = vmatprep.subr.mxu0 %v95
  %423 = vmatpush1.msra.mxu0 %v94
  %424 = vmatprep.subr.mxu0 %v106
  %425 = vmatpush1.msra.mxu0 %v105
  %426 = vmatprep.subr.mxu0 %v117
  %427 = vmatpush1.msra.mxu0 %v116
  %428 = vmatprep.subr.mxu0 %v128
  %429 = vmatpush1.msra.mxu0 %v127
  %430 = vmatprep.subr.mxu0 %v139
  %431 = vmatpush1.msra.mxu0 %v138
  %432 = vmatprep.subr.mxu0 %v150
  %433 = vmatpush1.msra.mxu0 %v149
  %434 = vmatprep.subr.mxu0 %v161
  %435 = vmatpush1.msra.mxu0 %v160
  %436 = vmatprep.subr.mxu0 %v172
  %437 = vmatpush1.msra.mxu0 %v171
  %438 = vmatprep.subr.mxu0 %v183
  %439 = vmatpush1.msra.mxu0 %v182
  %440 = vmatprep.subr.mxu0 %v194
  %441 = vmatpush1.msra.mxu0 %v193
  %442 = vmatprep.subr.mxu0 %v205
  %443 = vmatpush1.msra.mxu0 %v204
  %444 = vmatprep.subr.mxu0 0.0
  %445 = vmatpush1.msra.mxu0 0.0
  %446 = vmatprep.subr.mxu0 0.0
  %447 = vmatpush1.msra.mxu0 0.0
  %448 = vmatprep.subr.mxu0 0.0
  %449 = vmatpush1.msra.mxu0 0.0
  %450 = vmatprep.subr.mxu0 0.0
  %451 = vmatpush1.msra.mxu0 0.0
  %452 = vmatprep.subr.mxu0 0.0
  %453 = vmatpush1.msra.mxu0 0.0
  %454 = vmatprep.subr.mxu0 0.0
  %455 = vmatpush1.msra.mxu0 0.0
  %456 = vmatprep.subr.mxu0 0.0
  %457 = vmatpush1.msra.mxu0 0.0
  %458 = vmatprep.subr.mxu0 0.0
  %459 = vmatpush1.msra.mxu0 0.0
  %460 = vmatprep.subr.mxu0 0.0
  %461 = vmatpush1.msra.mxu0 0.0
  %462 = vmatprep.subr.mxu0 0.0
  %463 = vmatpush1.msra.mxu0 0.0
  %464 = vmatprep.subr.mxu0 0.0
  %465 = vmatpush1.msra.mxu0 0.0
  %466 = vmatprep.subr.mxu0 0.0
  %467 = vmatpush1.msra.mxu0 0.0
  %468 = vmatprep.subr.mxu0 0.0
  %469 = vmatpush1.msra.mxu0 0.0
  %470 = vmatprep.subr.mxu0 0.0
  %471 = vmatpush1.msra.mxu0 0.0
  %472 = vmatprep.subr.mxu0 0.0
  %473 = vmatpush1.msra.mxu0 0.0
  %474 = vmatprep.subr.mxu0 0.0
  %475 = vmatpush1.msra.mxu0 0.0
  %476 = vmatprep.mubr.f32.mxu0 0.0
  %477 = vmatmul.mubr.f32.gmra.mrb[0].mxu0 %v34
  %v478 = vpop.f32.mrb[0].mxu0
  %v479 = vadd.f32 %v234, %v478
  %v480 = vpop.f32.mrb[0].mxu0
  %v481 = vadd.f32 %v238, %v480
  %482 = vdwg.mxu0
  %483 = vmatprep.subr.mxu0 %v42
  %484 = vmatpush1.msra.mxu0 %v41
  %485 = vmatprep.subr.mxu0 %v53
  %486 = vmatpush1.msra.mxu0 %v52
  %487 = vmatprep.subr.mxu0 %v64
  %488 = vmatpush1.msra.mxu0 %v63
  %489 = vmatprep.subr.mxu0 %v75
  %490 = vmatpush1.msra.mxu0 %v74
  %491 = vmatprep.subr.mxu0 %v86
  %492 = vmatpush1.msra.mxu0 %v85
  %493 = vmatprep.subr.mxu0 %v97
  %494 = vmatpush1.msra.mxu0 %v96
  %495 = vmatprep.subr.mxu0 %v108
  %496 = vmatpush1.msra.mxu0 %v107
  %497 = vmatprep.subr.mxu0 %v119
  %498 = vmatpush1.msra.mxu0 %v118
  %499 = vmatprep.subr.mxu0 %v130
  %500 = vmatpush1.msra.mxu0 %v129
  %501 = vmatprep.subr.mxu0 %v141
  %502 = vmatpush1.msra.mxu0 %v140
  %503 = vmatprep.subr.mxu0 %v152
  %504 = vmatpush1.msra.mxu0 %v151
  %505 = vmatprep.subr.mxu0 %v163
  %506 = vmatpush1.msra.mxu0 %v162
  %507 = vmatprep.subr.mxu0 %v174
  %508 = vmatpush1.msra.mxu0 %v173
  %509 = vmatprep.subr.mxu0 %v185
  %510 = vmatpush1.msra.mxu0 %v184
  %511 = vmatprep.subr.mxu0 %v196
  %512 = vmatpush1.msra.mxu0 %v195
  %513 = vmatprep.subr.mxu0 %v207
  %514 = vmatpush1.msra.mxu0 %v206
  %515 = vmatprep.subr.mxu0 0.0
  %516 = vmatpush1.msra.mxu0 0.0
  %517 = vmatprep.subr.mxu0 0.0
  %518 = vmatpush1.msra.mxu0 0.0
  %519 = vmatprep.subr.mxu0 0.0
  %520 = vmatpush1.msra.mxu0 0.0
  %521 = vmatprep.subr.mxu0 0.0
  %522 = vmatpush1.msra.mxu0 0.0
  %523 = vmatprep.subr.mxu0 0.0
  %524 = vmatpush1.msra.mxu0 0.0
  %525 = vmatprep.subr.mxu0 0.0
  %526 = vmatpush1.msra.mxu0 0.0
  %527 = vmatprep.subr.mxu0 0.0
  %528 = vmatpush1.msra.mxu0 0.0
  %529 = vmatprep.subr.mxu0 0.0
  %530 = vmatpush1.msra.mxu0 0.0
  %531 = vmatprep.subr.mxu0 0.0
  %532 = vmatpush1.msra.mxu0 0.0
  %533 = vmatprep.subr.mxu0 0.0
  %534 = vmatpush1.msra.mxu0 0.0
  %535 = vmatprep.subr.mxu0 0.0
  %536 = vmatpush1.msra.mxu0 0.0
  %537 = vmatprep.subr.mxu0 0.0
  %538 = vmatpush1.msra.mxu0 0.0
  %539 = vmatprep.subr.mxu0 0.0
  %540 = vmatpush1.msra.mxu0 0.0
  %541 = vmatprep.subr.mxu0 0.0
  %542 = vmatpush1.msra.mxu0 0.0
  %543 = vmatprep.subr.mxu0 0.0
  %544 = vmatpush1.msra.mxu0 0.0
  %545 = vmatprep.subr.mxu0 0.0
  %546 = vmatpush1.msra.mxu0 0.0
  %547 = vmatprep.mubr.f32.mxu0 0.0
  %548 = vmatmul.mubr.f32.gmra.mrb[0].mxu0 %v34
  %v549 = vpop.f32.mrb[0].mxu0
  %v550 = vadd.f32 %v242, %v549
  %v551 = vpop.f32.mrb[0].mxu0
  %v552 = vadd.f32 %v246, %v551
  %553 = vdwg.mxu0
  %554 = vmatprep.subr.mxu0 %v44
  %555 = vmatpush1.msra.mxu0 %v43
  %556 = vmatprep.subr.mxu0 %v55
  %557 = vmatpush1.msra.mxu0 %v54
  %558 = vmatprep.subr.mxu0 %v66
  %559 = vmatpush1.msra.mxu0 %v65
  %560 = vmatprep.subr.mxu0 %v77
  %561 = vmatpush1.msra.mxu0 %v76
  %562 = vmatprep.subr.mxu0 %v88
  %563 = vmatpush1.msra.mxu0 %v87
  %564 = vmatprep.subr.mxu0 %v99
  %565 = vmatpush1.msra.mxu0 %v98
  %566 = vmatprep.subr.mxu0 %v110
  %567 = vmatpush1.msra.mxu0 %v109
  %568 = vmatprep.subr.mxu0 %v121
  %569 = vmatpush1.msra.mxu0 %v120
  %570 = vmatprep.subr.mxu0 %v132
  %571 = vmatpush1.msra.mxu0 %v131
  %572 = vmatprep.subr.mxu0 %v143
  %573 = vmatpush1.msra.mxu0 %v142
  %574 = vmatprep.subr.mxu0 %v154
  %575 = vmatpush1.msra.mxu0 %v153
  %576 = vmatprep.subr.mxu0 %v165
  %577 = vmatpush1.msra.mxu0 %v164
  %578 = vmatprep.subr.mxu0 %v176
  %579 = vmatpush1.msra.mxu0 %v175
  %580 = vmatprep.subr.mxu0 %v187
  %581 = vmatpush1.msra.mxu0 %v186
  %582 = vmatprep.subr.mxu0 %v198
  %583 = vmatpush1.msra.mxu0 %v197
  %584 = vmatprep.subr.mxu0 %v209
  %585 = vmatpush1.msra.mxu0 %v208
  %586 = vmatprep.subr.mxu0 0.0
  %587 = vmatpush1.msra.mxu0 0.0
  %588 = vmatprep.subr.mxu0 0.0
  %589 = vmatpush1.msra.mxu0 0.0
  %590 = vmatprep.subr.mxu0 0.0
  %591 = vmatpush1.msra.mxu0 0.0
  %592 = vmatprep.subr.mxu0 0.0
  %593 = vmatpush1.msra.mxu0 0.0
  %594 = vmatprep.subr.mxu0 0.0
  %595 = vmatpush1.msra.mxu0 0.0
  %596 = vmatprep.subr.mxu0 0.0
  %597 = vmatpush1.msra.mxu0 0.0
  %598 = vmatprep.subr.mxu0 0.0
  %599 = vmatpush1.msra.mxu0 0.0
  %600 = vmatprep.subr.mxu0 0.0
  %601 = vmatpush1.msra.mxu0 0.0
  %602 = vmatprep.subr.mxu0 0.0
  %603 = vmatpush1.msra.mxu0 0.0
  %604 = vmatprep.subr.mxu0 0.0
  %605 = vmatpush1.msra.mxu0 0.0
  %606 = vmatprep.subr.mxu0 0.0
  %607 = vmatpush1.msra.mxu0 0.0
  %608 = vmatprep.subr.mxu0 0.0
  %609 = vmatpush1.msra.mxu0 0.0
  %610 = vmatprep.subr.mxu0 0.0
  %611 = vmatpush1.msra.mxu0 0.0
  %612 = vmatprep.subr.mxu0 0.0
  %613 = vmatpush1.msra.mxu0 0.0
  %614 = vmatprep.subr.mxu0 0.0
  %615 = vmatpush1.msra.mxu0 0.0
  %616 = vmatprep.subr.mxu0 0.0
  %617 = vmatpush1.msra.mxu0 0.0
  %618 = vmatprep.mubr.f32.mxu0 0.0
  %619 = vmatmul.mubr.f32.gmra.mrb[0].mxu0 %v34
  %v620 = vpop.f32.mrb[0].mxu0
  %v621 = vadd.f32 %v250, %v620
  %v622 = vpop.f32.mrb[0].mxu0
  %v623 = vadd.f32 %v254, %v622
  %624 = vdwg.mxu0
  %625 = vmatprep.subr.mxu0 0.0
  %626 = vmatpush1.msra.mxu0 %v45
  %627 = vmatprep.subr.mxu0 0.0
  %628 = vmatpush1.msra.mxu0 %v56
  %629 = vmatprep.subr.mxu0 0.0
  %630 = vmatpush1.msra.mxu0 %v67
  %631 = vmatprep.subr.mxu0 0.0
  %632 = vmatpush1.msra.mxu0 %v78
  %633 = vmatprep.subr.mxu0 0.0
  %634 = vmatpush1.msra.mxu0 %v89
  %635 = vmatprep.subr.mxu0 0.0
  %636 = vmatpush1.msra.mxu0 %v100
  %637 = vmatprep.subr.mxu0 0.0
  %638 = vmatpush1.msra.mxu0 %v111
  %639 = vmatprep.subr.mxu0 0.0
  %640 = vmatpush1.msra.mxu0 %v122
  %641 = vmatprep.subr.mxu0 0.0
  %642 = vmatpush1.msra.mxu0 %v133
  %643 = vmatprep.subr.mxu0 0.0
  %644 = vmatpush1.msra.mxu0 %v144
  %645 = vmatprep.subr.mxu0 0.0
  %646 = vmatpush1.msra.mxu0 %v155
  %647 = vmatprep.subr.mxu0 0.0
  %648 = vmatpush1.msra.mxu0 %v166
  %649 = vmatprep.subr.mxu0 0.0
  %650 = vmatpush1.msra.mxu0 %v177
  %651 = vmatprep.subr.mxu0 0.0
  %652 = vmatpush1.msra.mxu0 %v188
  %653 = vmatprep.subr.mxu0 0.0
  %654 = vmatpush1.msra.mxu0 %v199
  %655 = vmatprep.subr.mxu0 0.0
  %656 = vmatpush1.msra.mxu0 %v210
  %657 = vmatprep.subr.mxu0 0.0
  %658 = vmatpush1.msra.mxu0 0.0
  %659 = vmatprep.subr.mxu0 0.0
  %660 = vmatpush1.msra.mxu0 0.0
  %661 = vmatprep.subr.mxu0 0.0
  %662 = vmatpush1.msra.mxu0 0.0
  %663 = vmatprep.subr.mxu0 0.0
  %664 = vmatpush1.msra.mxu0 0.0
  %665 = vmatprep.subr.mxu0 0.0
  %666 = vmatpush1.msra.mxu0 0.0
  %667 = vmatprep.subr.mxu0 0.0
  %668 = vmatpush1.msra.mxu0 0.0
  %669 = vmatprep.subr.mxu0 0.0
  %670 = vmatpush1.msra.mxu0 0.0
  %671 = vmatprep.subr.mxu0 0.0
  %672 = vmatpush1.msra.mxu0 0.0
  %673 = vmatprep.subr.mxu0 0.0
  %674 = vmatpush1.msra.mxu0 0.0
  %675 = vmatprep.subr.mxu0 0.0
  %676 = vmatpush1.msra.mxu0 0.0
  %677 = vmatprep.subr.mxu0 0.0
  %678 = vmatpush1.msra.mxu0 0.0
  %679 = vmatprep.subr.mxu0 0.0
  %680 = vmatpush1.msra.mxu0 0.0
  %681 = vmatprep.subr.mxu0 0.0
  %682 = vmatpush1.msra.mxu0 0.0
  %683 = vmatprep.subr.mxu0 0.0
  %684 = vmatpush1.msra.mxu0 0.0
  %685 = vmatprep.subr.mxu0 0.0
  %686 = vmatpush1.msra.mxu0 0.0
  %687 = vmatprep.subr.mxu0 0.0
  %688 = vmatpush1.msra.mxu0 0.0
  %689 = vmatprep.mubr.f32.mxu0 0.0
  %690 = vmatmul.mubr.f32.gmra.mrb[0].mxu0 %v34
  %v691 = vpop.f32.mrb[0].mxu0
  %v692 = vadd.f32 %v258, %v691
  %v693 = vpop.f32.mrb[0].mxu0
  %694 = vdwg.mxu0
  %v695 = vmax.f32 %v337, 0.0
  %v696 = vmax.f32 %v339, 0.0
  %v697 = vmax.f32 %v408, 0.0
  %v698 = vmax.f32 %v410, 0.0
  %v699 = vmax.f32 %v479, 0.0
  %v700 = vmax.f32 %v481, 0.0
  %v701 = vmax.f32 %v550, 0.0
  %v702 = vmax.f32 %v552, 0.0
  %v703 = vmax.f32 %v621, 0.0
  %v704 = vmax.f32 %v623, 0.0
  %v705 = vmax.f32 %v692, 0.0
  %v706 = vld [vmem:[%s3] sm:$0xff]
  %v707 = vld [vmem:[%s3 + $0x8] sm:$0xff]
  %v708 = vld [vmem:[%s3 + $0x10] sm:$0xff]
  %v709 = vld [vmem:[%s3 + $0x18] sm:$0xff]
  %v710 = vld [vmem:[%s3 + $0x20] sm:$0xff]
  %v711 = vld [vmem:[%s3 + $0x28] sm:$0xff]
  %v712 = vld [vmem:[%s3 + $0x30] sm:$0xff]
  %v713 = vld [vmem:[%s3 + $0x38] sm:$0xff]
  %v714 = vld [vmem:[%s3 + $0x40] sm:$0xff]
  %v715 = vld [vmem:[%s3 + $0x48] sm:$0xff]
  %v716 = vld [vmem:[%s3 + $0x50] sm:$0xff]
  %v717 = vld [vmem:[%s3 + $0x58] sm:$0xff]
  %v718 = vld [vmem:[%s3 + $0x60] sm:$0xff]
  %v719 = vld [vmem:[%s3 + $0x68] sm:$0xff]
  %v720 = vld [vmem:[%s3 + $0x70] sm:$0xff]
  %v721 = vld [vmem:[%s3 + $0x78] sm:$0xff]
  %v722 = vld [vmem:[%s3 + $0x80] sm:$0xff]
  %v723 = vld [vmem:[%s3 + $0x88] sm:$0xff]
  %v724 = vld [vmem:[%s3 + $0x90] sm:$0xff]
  %v725 = vld [vmem:[%s3 + $0x98] sm:$0xff]
  %v726 = vld [vmem:[%s3 + $0xa0] sm:$0xff]
  %v727 = vld [vmem:[%s3 + $0xa8] sm:$0xff]
  %v728 = vld [vmem:[%s3 + $0xb0] sm:$0xff]
  %v729 = vld [vmem:[%s3 + $0xb8] sm:$0xff]
  %v730 = vld [vmem:[%s3 + $0xc0] sm:$0xff]
  %v731 = vld [vmem:[%s3 + $0xc8] sm:$0xff]
  %v732 = vld [vmem:[%s3 + $0xd0] sm:$0xff]
  %v733 = vld [vmem:[%s3 + $0xd8] sm:$0xff]
  %v734 = vld [vmem:[%s3 + $0xe0] sm:$0xff]
  %v735 = vld [vmem:[%s3 + $0xe8] sm:$0xff]
  %v736 = vld [vmem:[%s3 + $0xf0] sm:$0xff]
  %v737 = vld [vmem:[%s3 + $0xf8] sm:$0xff]
  %v738 = vld [vmem:[%s3 + $0x100] sm:$0xff]
  %v739 = vld [vmem:[%s3 + $0x108] sm:$0xff]
  %v740 = vld [vmem:[%s3 + $0x110] sm:$0xff]
  %v741 = vld [vmem:[%s3 + $0x118] sm:$0xff]
  %v742 = vld [vmem:[%s3 + $0x120] sm:$0xff]
  %v743 = vld [vmem:[%s3 + $0x128] sm:$0xff]
  %v744 = vld [vmem:[%s3 + $0x130] sm:$0xff]
  %v745 = vld [vmem:[%s3 + $0x138] sm:$0xff]
  %v746 = vld [vmem:[%s3 + $0x140] sm:$0xff]
  %v747 = vld [vmem:[%s3 + $0x148] sm:$0xff]
  %v748 = vld [vmem:[%s3 + $0x150] sm:$0xff]
  %v749 = vld [vmem:[%s3 + $0x158] sm:$0xff]
  %v750 = vld [vmem:[%s3 + $0x160] sm:$0xff]
  %v751 = vld [vmem:[%s3 + $0x168] sm:$0xff]
  %v752 = vld [vmem:[%s3 + $0x170] sm:$0xff]
  %v753 = vld [vmem:[%s3 + $0x178] sm:$0xff]
  %v754 = vld [vmem:[%s3 + $0x180] sm:$0xff]
  %v755 = vld [vmem:[%s3 + $0x188] sm:$0xff]
  %v756 = vld [vmem:[%s3 + $0x190] sm:$0xff]
  %v757 = vld [vmem:[%s3 + $0x198] sm:$0xff]
  %v758 = vld [vmem:[%s3 + $0x1a0] sm:$0xff]
  %v759 = vld [vmem:[%s3 + $0x1a8] sm:$0xff]
  %v760 = vld [vmem:[%s3 + $0x1b0] sm:$0xff]
  %v761 = vld [vmem:[%s3 + $0x1b8] sm:$0xff]
  %v762 = vld [vmem:[%s3 + $0x1c0] sm:$0xff]
  %v763 = vld [vmem:[%s3 + $0x1c8] sm:$0xff]
  %v764 = vld [vmem:[%s3 + $0x1d0] sm:$0xff]
  %v765 = vld [vmem:[%s3 + $0x1d8] sm:$0xff]
  %v766 = vld [vmem:[%s3 + $0x1e0] sm:$0xff]
  %v767 = vld [vmem:[%s3 + $0x1e8] sm:$0xff]
  %v768 = vld [vmem:[%s3 + $0x1f0] sm:$0xff]
  %v769 = vld [vmem:[%s3 + $0x1f8] sm:$0xff]
  %v770 = vld [vmem:[%s3 + $0x200] sm:$0xff]
  %v771 = vld [vmem:[%s3 + $0x208] sm:$0xff]
  %v772 = vld [vmem:[%s3 + $0x210] sm:$0xff]
  %v773 = vld [vmem:[%s3 + $0x218] sm:$0xff]
  %v774 = vld [vmem:[%s3 + $0x220] sm:$0xff]
  %v775 = vld [vmem:[%s3 + $0x228] sm:$0xff]
  %v776 = vld [vmem:[%s3 + $0x230] sm:$0xff]
  %v777 = vld [vmem:[%s3 + $0x238] sm:$0xff]
  %v778 = vld [vmem:[%s3 + $0x240] sm:$0xff]
  %v779 = vld [vmem:[%s3 + $0x248] sm:$0xff]
  %v780 = vld [vmem:[%s3 + $0x250] sm:$0xff]
  %v781 = vld [vmem:[%s3 + $0x258] sm:$0xff]
  %v782 = vld [vmem:[%s3 + $0x260] sm:$0xff]
  %v783 = vld [vmem:[%s3 + $0x268] sm:$0xff]
  %v784 = vld [vmem:[%s3 + $0x270] sm:$0xff]
  %v785 = vld [vmem:[%s3 + $0x278] sm:$0xff]
  %v786 = vld [vmem:[%s3 + $0x280] sm:$0xff]
  %v787 = vld [vmem:[%s3 + $0x288] sm:$0xff]
  %v788 = vld [vmem:[%s3 + $0x290] sm:$0xff]
  %v789 = vld [vmem:[%s3 + $0x298] sm:$0xff]
  %v790 = vld [vmem:[%s3 + $0x2a0] sm:$0xff]
  %v791 = vld [vmem:[%s3 + $0x2a8] sm:$0xff]
  %v792 = vld [vmem:[%s3 + $0x2b0] sm:$0xff]
  %v793 = vld [vmem:[%s3 + $0x2b8] sm:$0xff]
  %v794 = vld [vmem:[%s3 + $0x2c0] sm:$0xff]
  %v795 = vld [vmem:[%s3 + $0x2c8] sm:$0xff]
  %v796 = vld [vmem:[%s3 + $0x2d0] sm:$0xff]
  %v797 = vld [vmem:[%s3 + $0x2d8] sm:$0xff]
  %v798 = vld [vmem:[%s3 + $0x2e0] sm:$0xff]
  %v799 = vld [vmem:[%s3 + $0x2e8] sm:$0xff]
  %v800 = vld [vmem:[%s3 + $0x2f0] sm:$0xff]
  %v801 = vld [vmem:[%s3 + $0x2f8] sm:$0xff]
  %v802 = vld [vmem:[%s3 + $0x300] sm:$0xff]
  %v803 = vld [vmem:[%s3 + $0x308] sm:$0xff]
  %v804 = vld [vmem:[%s3 + $0x310] sm:$0xff]
  %v805 = vld [vmem:[%s3 + $0x318] sm:$0xff]
  %v806 = vld [vmem:[%s3 + $0x320] sm:$0xff]
  %v807 = vld [vmem:[%s3 + $0x328] sm:$0xff]
  %v808 = vld [vmem:[%s3 + $0x330] sm:$0xff]
  %v809 = vld [vmem:[%s3 + $0x338] sm:$0xff]
  %v810 = vld [vmem:[%s3 + $0x340] sm:$0xff]
  %v811 = vld [vmem:[%s3 + $0x348] sm:$0xff]
  %v812 = vld [vmem:[%s3 + $0x350] sm:$0xff]
  %v813 = vld [vmem:[%s3 + $0x358] sm:$0xff]
  %v814 = vld [vmem:[%s3 + $0x360] sm:$0xff]
  %v815 = vld [vmem:[%s3 + $0x368] sm:$0xff]
  %v816 = vld [vmem:[%s3 + $0x370] sm:$0xff]
  %v817 = vld [vmem:[%s3 + $0x378] sm:$0xff]
  %v818 = vld [vmem:[%s3 + $0x380] sm:$0xff]
  %v819 = vld [vmem:[%s3 + $0x388] sm:$0xff]
  %v820 = vld [vmem:[%s3 + $0x390] sm:$0xff]
  %v821 = vld [vmem:[%s3 + $0x398] sm:$0xff]
  %v822 = vld [vmem:[%s3 + $0x3a0] sm:$0xff]
  %v823 = vld [vmem:[%s3 + $0x3a8] sm:$0xff]
  %v824 = vld [vmem:[%s3 + $0x3b0] sm:$0xff]
  %v825 = vld [vmem:[%s3 + $0x3b8] sm:$0xff]
  %v826 = vld [vmem:[%s3 + $0x3c0] sm:$0xff]
  %v827 = vld [vmem:[%s3 + $0x3c8] sm:$0xff]
  %v828 = vld [vmem:[%s3 + $0x3d0] sm:$0xff]
  %v829 = vld [vmem:[%s3 + $0x3d8] sm:$0xff]
  %v830 = vld [vmem:[%s3 + $0x3e0] sm:$0xff]
  %v831 = vld [vmem:[%s3 + $0x3e8] sm:$0xff]
  %v832 = vld [vmem:[%s3 + $0x3f0] sm:$0xff]
  %v833 = vld [vmem:[%s3 + $0x3f8] sm:$0xff]
  %v834 = vld [vmem:[%s3 + $0x400] sm:$0xff]
  %v835 = vld [vmem:[%s3 + $0x408] sm:$0xff]
  %v836 = vld [vmem:[%s3 + $0x410] sm:$0xff]
  %v837 = vld [vmem:[%s3 + $0x418] sm:$0xff]
  %v838 = vld [vmem:[%s3 + $0x420] sm:$0xff]
  %v839 = vld [vmem:[%s3 + $0x428] sm:$0xff]
  %v840 = vld [vmem:[%s3 + $0x430] sm:$0xff]
  %v841 = vld [vmem:[%s3 + $0x438] sm:$0xff]
  %v842 = vld [vmem:[%s3 + $0x440] sm:$0xff]
  %v843 = vld [vmem:[%s3 + $0x448] sm:$0xff]
  %v844 = vld [vmem:[%s3 + $0x450] sm:$0xff]
  %v845 = vld [vmem:[%s3 + $0x458] sm:$0xff]
  %v846 = vld [vmem:[%s3 + $0x460] sm:$0xff]
  %v847 = vld [vmem:[%s3 + $0x468] sm:$0xff]
  %v848 = vld [vmem:[%s3 + $0x470] sm:$0xff]
  %v849 = vld [vmem:[%s3 + $0x478] sm:$0xff]
  %v850 = vld [vmem:[%s3 + $0x480] sm:$0xff]
  %v851 = vld [vmem:[%s3 + $0x488] sm:$0xff]
  %v852 = vld [vmem:[%s3 + $0x490] sm:$0xff]
  %v853 = vld [vmem:[%s3 + $0x498] sm:$0xff]
  %v854 = vld [vmem:[%s3 + $0x4a0] sm:$0xff]
  %v855 = vld [vmem:[%s3 + $0x4a8] sm:$0xff]
  %v856 = vld [vmem:[%s3 + $0x4b0] sm:$0xff]
  %v857 = vld [vmem:[%s3 + $0x4b8] sm:$0xff]
  %v858 = vld [vmem:[%s3 + $0x4c0] sm:$0xff]
  %v859 = vld [vmem:[%s3 + $0x4c8] sm:$0xff]
  %v860 = vld [vmem:[%s3 + $0x4d0] sm:$0xff]
  %v861 = vld [vmem:[%s3 + $0x4d8] sm:$0xff]
  %v862 = vld [vmem:[%s3 + $0x4e0] sm:$0xff]
  %v863 = vld [vmem:[%s3 + $0x4e8] sm:$0xff]
  %v864 = vld [vmem:[%s3 + $0x4f0] sm:$0xff]
  %v865 = vld [vmem:[%s3 + $0x4f8] sm:$0xff]
  %v866 = vld [vmem:[%s3 + $0x500] sm:$0xff]
  %v867 = vld [vmem:[%s3 + $0x508] sm:$0xff]
  %v868 = vld [vmem:[%s4] sm:$0x1]
  %v870 = vlaneseq
  %v871 = vshrl.u32 %v870, 7
  %v872 = vsub.s32 0, %v871
  %v873 = vrot.slane %v868, %v872
  %vm875 = vcmask 130048
  %v877 = vsel %vm875, %v705, 0
  %879 = vmatprep.subr.mxu0 0.0
  %880 = vmatpush1.msra.mxu0 %v706
  %881 = vmatprep.subr.mxu0 0.0
  %882 = vmatpush1.msra.mxu0 %v707
  %883 = vmatprep.subr.mxu0 0.0
  %884 = vmatpush1.msra.mxu0 %v708
  %885 = vmatprep.subr.mxu0 0.0
  %886 = vmatpush1.msra.mxu0 %v709
  %887 = vmatprep.subr.mxu0 0.0
  %888 = vmatpush1.msra.mxu0 %v710
  %889 = vmatprep.subr.mxu0 0.0
  %890 = vmatpush1.msra.mxu0 %v711
  %891 = vmatprep.subr.mxu0 0.0
  %892 = vmatpush1.msra.mxu0 %v712
  %893 = vmatprep.subr.mxu0 0.0
  %894 = vmatpush1.msra.mxu0 %v713
  %895 = vmatprep.subr.mxu0 0.0
  %896 = vmatpush1.msra.mxu0 %v714
  %897 = vmatprep.subr.mxu0 0.0
  %898 = vmatpush1.msra.mxu0 %v715
  %899 = vmatprep.subr.mxu0 0.0
  %900 = vmatpush1.msra.mxu0 %v716
  %901 = vmatprep.subr.mxu0 0.0
  %902 = vmatpush1.msra.mxu0 %v717
  %903 = vmatprep.subr.mxu0 0.0
  %904 = vmatpush1.msra.mxu0 %v718
  %905 = vmatprep.subr.mxu0 0.0
  %906 = vmatpush1.msra.mxu0 %v719
  %907 = vmatprep.subr.mxu0 0.0
  %908 = vmatpush1.msra.mxu0 %v720
  %909 = vmatprep.subr.mxu0 0.0
  %910 = vmatpush1.msra.mxu0 %v721
  %911 = vmatprep.subr.mxu0 0.0
  %912 = vmatpush1.msra.mxu0 %v722
  %913 = vmatprep.subr.mxu0 0.0
  %914 = vmatpush1.msra.mxu0 %v723
  %915 = vmatprep.subr.mxu0 0.0
  %916 = vmatpush1.msra.mxu0 %v724
  %917 = vmatprep.subr.mxu0 0.0
  %918 = vmatpush1.msra.mxu0 %v725
  %919 = vmatprep.subr.mxu0 0.0
  %920 = vmatpush1.msra.mxu0 %v726
  %921 = vmatprep.subr.mxu0 0.0
  %922 = vmatpush1.msra.mxu0 %v727
  %923 = vmatprep.subr.mxu0 0.0
  %924 = vmatpush1.msra.mxu0 %v728
  %925 = vmatprep.subr.mxu0 0.0
  %926 = vmatpush1.msra.mxu0 %v729
  %927 = vmatprep.subr.mxu0 0.0
  %928 = vmatpush1.msra.mxu0 %v730
  %929 = vmatprep.subr.mxu0 0.0
  %930 = vmatpush1.msra.mxu0 %v731
  %931 = vmatprep.subr.mxu0 0.0
  %932 = vmatpush1.msra.mxu0 %v732
  %933 = vmatprep.subr.mxu0 0.0
  %934 = vmatpush1.msra.mxu0 %v733
  %935 = vmatprep.subr.mxu0 0.0
  %936 = vmatpush1.msra.mxu0 %v734
  %937 = vmatprep.subr.mxu0 0.0
  %938 = vmatpush1.msra.mxu0 %v735
  %939 = vmatprep.subr.mxu0 0.0
  %940 = vmatpush1.msra.mxu0 %v736
  %941 = vmatprep.subr.mxu0 0.0
  %942 = vmatpush1.msra.mxu0 %v737
  %943 = vmatprep.mubr.f32.mxu0 %v696
  %944 = vmatmul.mubr.f32.gmra.mrb[0].mxu0 %v695
  %v945 = vpop.f32.mrb[0].mxu0
  %v946 = vadd.f32 %v873, %v945
  %v947 = vpop.f32.mrb[0].mxu0
  %948 = vdwg.mxu0
  %949 = vmatprep.subr.mxu0 0.0
  %950 = vmatpush1.msra.mxu0 %v738
  %951 = vmatprep.subr.mxu0 0.0
  %952 = vmatpush1.msra.mxu0 %v739
  %953 = vmatprep.subr.mxu0 0.0
  %954 = vmatpush1.msra.mxu0 %v740
  %955 = vmatprep.subr.mxu0 0.0
  %956 = vmatpush1.msra.mxu0 %v741
  %957 = vmatprep.subr.mxu0 0.0
  %958 = vmatpush1.msra.mxu0 %v742
  %959 = vmatprep.subr.mxu0 0.0
  %960 = vmatpush1.msra.mxu0 %v743
  %961 = vmatprep.subr.mxu0 0.0
  %962 = vmatpush1.msra.mxu0 %v744
  %963 = vmatprep.subr.mxu0 0.0
  %964 = vmatpush1.msra.mxu0 %v745
  %965 = vmatprep.subr.mxu0 0.0
  %966 = vmatpush1.msra.mxu0 %v746
  %967 = vmatprep.subr.mxu0 0.0
  %968 = vmatpush1.msra.mxu0 %v747
  %969 = vmatprep.subr.mxu0 0.0
  %970 = vmatpush1.msra.mxu0 %v748
  %971 = vmatprep.subr.mxu0 0.0
  %972 = vmatpush1.msra.mxu0 %v749
  %973 = vmatprep.subr.mxu0 0.0
  %974 = vmatpush1.msra.mxu0 %v750
  %975 = vmatprep.subr.mxu0 0.0
  %976 = vmatpush1.msra.mxu0 %v751
  %977 = vmatprep.subr.mxu0 0.0
  %978 = vmatpush1.msra.mxu0 %v752
  %979 = vmatprep.subr.mxu0 0.0
  %980 = vmatpush1.msra.mxu0 %v753
  %981 = vmatprep.subr.mxu0 0.0
  %982 = vmatpush1.msra.mxu0 %v754
  %983 = vmatprep.subr.mxu0 0.0
  %984 = vmatpush1.msra.mxu0 %v755
  %985 = vmatprep.subr.mxu0 0.0
  %986 = vmatpush1.msra.mxu0 %v756
  %987 = vmatprep.subr.mxu0 0.0
  %988 = vmatpush1.msra.mxu0 %v757
  %989 = vmatprep.subr.mxu0 0.0
  %990 = vmatpush1.msra.mxu0 %v758
  %991 = vmatprep.subr.mxu0 0.0
  %992 = vmatpush1.msra.mxu0 %v759
  %993 = vmatprep.subr.mxu0 0.0
  %994 = vmatpush1.msra.mxu0 %v760
  %995 = vmatprep.subr.mxu0 0.0
  %996 = vmatpush1.msra.mxu0 %v761
  %997 = vmatprep.subr.mxu0 0.0
  %998 = vmatpush1.msra.mxu0 %v762
  %999 = vmatprep.subr.mxu0 0.0
  %1000 = vmatpush1.msra.mxu0 %v763
  %1001 = vmatprep.subr.mxu0 0.0
  %1002 = vmatpush1.msra.mxu0 %v764
  %1003 = vmatprep.subr.mxu0 0.0
  %1004 = vmatpush1.msra.mxu0 %v765
  %1005 = vmatprep.subr.mxu0 0.0
  %1006 = vmatpush1.msra.mxu0 %v766
  %1007 = vmatprep.subr.mxu0 0.0
  %1008 = vmatpush1.msra.mxu0 %v767
  %1009 = vmatprep.subr.mxu0 0.0
  %1010 = vmatpush1.msra.mxu0 %v768
  %1011 = vmatprep.subr.mxu0 0.0
  %1012 = vmatpush1.msra.mxu0 %v769
  %1013 = vmatprep.mubr.f32.mxu0 %v698
  %1014 = vmatmul.mubr.f32.gmra.mrb[0].mxu0 %v697
  %v1015 = vpop.f32.mrb[0].mxu0
  %v1016 = vadd.f32 %v946, %v1015
  %v1017 = vpop.f32.mrb[0].mxu0
  %1018 = vdwg.mxu0
  %1019 = vmatprep.subr.mxu0 0.0
  %1020 = vmatpush1.msra.mxu0 %v770
  %1021 = vmatprep.subr.mxu0 0.0
  %1022 = vmatpush1.msra.mxu0 %v771
  %1023 = vmatprep.subr.mxu0 0.0
  %1024 = vmatpush1.msra.mxu0 %v772
  %1025 = vmatprep.subr.mxu0 0.0
  %1026 = vmatpush1.msra.mxu0 %v773
  %1027 = vmatprep.subr.mxu0 0.0
  %1028 = vmatpush1.msra.mxu0 %v774
  %1029 = vmatprep.subr.mxu0 0.0
  %1030 = vmatpush1.msra.mxu0 %v775
  %1031 = vmatprep.subr.mxu0 0.0
  %1032 = vmatpush1.msra.mxu0 %v776
  %1033 = vmatprep.subr.mxu0 0.0
  %1034 = vmatpush1.msra.mxu0 %v777
  %1035 = vmatprep.subr.mxu0 0.0
  %1036 = vmatpush1.msra.mxu0 %v778
  %1037 = vmatprep.subr.mxu0 0.0
  %1038 = vmatpush1.msra.mxu0 %v779
  %1039 = vmatprep.subr.mxu0 0.0
  %1040 = vmatpush1.msra.mxu0 %v780
  %1041 = vmatprep.subr.mxu0 0.0
  %1042 = vmatpush1.msra.mxu0 %v781
  %1043 = vmatprep.subr.mxu0 0.0
  %1044 = vmatpush1.msra.mxu0 %v782
  %1045 = vmatprep.subr.mxu0 0.0
  %1046 = vmatpush1.msra.mxu0 %v783
  %1047 = vmatprep.subr.mxu0 0.0
  %1048 = vmatpush1.msra.mxu0 %v784
  %1049 = vmatprep.subr.mxu0 0.0
  %1050 = vmatpush1.msra.mxu0 %v785
  %1051 = vmatprep.subr.mxu0 0.0
  %1052 = vmatpush1.msra.mxu0 %v786
  %1053 = vmatprep.subr.mxu0 0.0
  %1054 = vmatpush1.msra.mxu0 %v787
  %1055 = vmatprep.subr.mxu0 0.0
  %1056 = vmatpush1.msra.mxu0 %v788
  %1057 = vmatprep.subr.mxu0 0.0
  %1058 = vmatpush1.msra.mxu0 %v789
  %1059 = vmatprep.subr.mxu0 0.0
  %1060 = vmatpush1.msra.mxu0 %v790
  %1061 = vmatprep.subr.mxu0 0.0
  %1062 = vmatpush1.msra.mxu0 %v791
  %1063 = vmatprep.subr.mxu0 0.0
  %1064 = vmatpush1.msra.mxu0 %v792
  %1065 = vmatprep.subr.mxu0 0.0
  %1066 = vmatpush1.msra.mxu0 %v793
  %1067 = vmatprep.subr.mxu0 0.0
  %1068 = vmatpush1.msra.mxu0 %v794
  %1069 = vmatprep.subr.mxu0 0.0
  %1070 = vmatpush1.msra.mxu0 %v795
  %1071 = vmatprep.subr.mxu0 0.0
  %1072 = vmatpush1.msra.mxu0 %v796
  %1073 = vmatprep.subr.mxu0 0.0
  %1074 = vmatpush1.msra.mxu0 %v797
  %1075 = vmatprep.subr.mxu0 0.0
  %1076 = vmatpush1.msra.mxu0 %v798
  %1077 = vmatprep.subr.mxu0 0.0
  %1078 = vmatpush1.msra.mxu0 %v799
  %1079 = vmatprep.subr.mxu0 0.0
  %1080 = vmatpush1.msra.mxu0 %v800
  %1081 = vmatprep.subr.mxu0 0.0
  %1082 = vmatpush1.msra.mxu0 %v801
  %1083 = vmatprep.mubr.f32.mxu0 %v700
  %1084 = vmatmul.mubr.f32.gmra.mrb[0].mxu0 %v699
  %v1085 = vpop.f32.mrb[0].mxu0
  %v1086 = vadd.f32 %v1016, %v1085
  %v1087 = vpop.f32.mrb[0].mxu0
  %1088 = vdwg.mxu0
  %1089 = vmatprep.subr.mxu0 0.0
  %1090 = vmatpush1.msra.mxu0 %v802
  %1091 = vmatprep.subr.mxu0 0.0
  %1092 = vmatpush1.msra.mxu0 %v803
  %1093 = vmatprep.subr.mxu0 0.0
  %1094 = vmatpush1.msra.mxu0 %v804
  %1095 = vmatprep.subr.mxu0 0.0
  %1096 = vmatpush1.msra.mxu0 %v805
  %1097 = vmatprep.subr.mxu0 0.0
  %1098 = vmatpush1.msra.mxu0 %v806
  %1099 = vmatprep.subr.mxu0 0.0
  %1100 = vmatpush1.msra.mxu0 %v807
  %1101 = vmatprep.subr.mxu0 0.0
  %1102 = vmatpush1.msra.mxu0 %v808
  %1103 = vmatprep.subr.mxu0 0.0
  %1104 = vmatpush1.msra.mxu0 %v809
  %1105 = vmatprep.subr.mxu0 0.0
  %1106 = vmatpush1.msra.mxu0 %v810
  %1107 = vmatprep.subr.mxu0 0.0
  %1108 = vmatpush1.msra.mxu0 %v811
  %1109 = vmatprep.subr.mxu0 0.0
  %1110 = vmatpush1.msra.mxu0 %v812
  %1111 = vmatprep.subr.mxu0 0.0
  %1112 = vmatpush1.msra.mxu0 %v813
  %1113 = vmatprep.subr.mxu0 0.0
  %1114 = vmatpush1.msra.mxu0 %v814
  %1115 = vmatprep.subr.mxu0 0.0
  %1116 = vmatpush1.msra.mxu0 %v815
  %1117 = vmatprep.subr.mxu0 0.0
  %1118 = vmatpush1.msra.mxu0 %v816
  %1119 = vmatprep.subr.mxu0 0.0
  %1120 = vmatpush1.msra.mxu0 %v817
  %1121 = vmatprep.subr.mxu0 0.0
  %1122 = vmatpush1.msra.mxu0 %v818
  %1123 = vmatprep.subr.mxu0 0.0
  %1124 = vmatpush1.msra.mxu0 %v819
  %1125 = vmatprep.subr.mxu0 0.0
  %1126 = vmatpush1.msra.mxu0 %v820
  %1127 = vmatprep.subr.mxu0 0.0
  %1128 = vmatpush1.msra.mxu0 %v821
  %1129 = vmatprep.subr.mxu0 0.0
  %1130 = vmatpush1.msra.mxu0 %v822
  %1131 = vmatprep.subr.mxu0 0.0
  %1132 = vmatpush1.msra.mxu0 %v823
  %1133 = vmatprep.subr.mxu0 0.0
  %1134 = vmatpush1.msra.mxu0 %v824
  %1135 = vmatprep.subr.mxu0 0.0
  %1136 = vmatpush1.msra.mxu0 %v825
  %1137 = vmatprep.subr.mxu0 0.0
  %1138 = vmatpush1.msra.mxu0 %v826
  %1139 = vmatprep.subr.mxu0 0.0
  %1140 = vmatpush1.msra.mxu0 %v827
  %1141 = vmatprep.subr.mxu0 0.0
  %1142 = vmatpush1.msra.mxu0 %v828
  %1143 = vmatprep.subr.mxu0 0.0
  %1144 = vmatpush1.msra.mxu0 %v829
  %1145 = vmatprep.subr.mxu0 0.0
  %1146 = vmatpush1.msra.mxu0 %v830
  %1147 = vmatprep.subr.mxu0 0.0
  %1148 = vmatpush1.msra.mxu0 %v831
  %1149 = vmatprep.subr.mxu0 0.0
  %1150 = vmatpush1.msra.mxu0 %v832
  %1151 = vmatprep.subr.mxu0 0.0
  %1152 = vmatpush1.msra.mxu0 %v833
  %1153 = vmatprep.mubr.f32.mxu0 %v702
  %1154 = vmatmul.mubr.f32.gmra.mrb[0].mxu0 %v701
  %v1155 = vpop.f32.mrb[0].mxu0
  %v1156 = vadd.f32 %v1086, %v1155
  %v1157 = vpop.f32.mrb[0].mxu0
  %1158 = vdwg.mxu0
  %1159 = vmatprep.subr.mxu0 0.0
  %1160 = vmatpush1.msra.mxu0 %v834
  %1161 = vmatprep.subr.mxu0 0.0
  %1162 = vmatpush1.msra.mxu0 %v835
  %1163 = vmatprep.subr.mxu0 0.0
  %1164 = vmatpush1.msra.mxu0 %v836
  %1165 = vmatprep.subr.mxu0 0.0
  %1166 = vmatpush1.msra.mxu0 %v837
  %1167 = vmatprep.subr.mxu0 0.0
  %1168 = vmatpush1.msra.mxu0 %v838
  %1169 = vmatprep.subr.mxu0 0.0
  %1170 = vmatpush1.msra.mxu0 %v839
  %1171 = vmatprep.subr.mxu0 0.0
  %1172 = vmatpush1.msra.mxu0 %v840
  %1173 = vmatprep.subr.mxu0 0.0
  %1174 = vmatpush1.msra.mxu0 %v841
  %1175 = vmatprep.subr.mxu0 0.0
  %1176 = vmatpush1.msra.mxu0 %v842
  %1177 = vmatprep.subr.mxu0 0.0
  %1178 = vmatpush1.msra.mxu0 %v843
  %1179 = vmatprep.subr.mxu0 0.0
  %1180 = vmatpush1.msra.mxu0 %v844
  %1181 = vmatprep.subr.mxu0 0.0
  %1182 = vmatpush1.msra.mxu0 %v845
  %1183 = vmatprep.subr.mxu0 0.0
  %1184 = vmatpush1.msra.mxu0 %v846
  %1185 = vmatprep.subr.mxu0 0.0
  %1186 = vmatpush1.msra.mxu0 %v847
  %1187 = vmatprep.subr.mxu0 0.0
  %1188 = vmatpush1.msra.mxu0 %v848
  %1189 = vmatprep.subr.mxu0 0.0
  %1190 = vmatpush1.msra.mxu0 %v849
  %1191 = vmatprep.subr.mxu0 0.0
  %1192 = vmatpush1.msra.mxu0 %v850
  %1193 = vmatprep.subr.mxu0 0.0
  %1194 = vmatpush1.msra.mxu0 %v851
  %1195 = vmatprep.subr.mxu0 0.0
  %1196 = vmatpush1.msra.mxu0 %v852
  %1197 = vmatprep.subr.mxu0 0.0
  %1198 = vmatpush1.msra.mxu0 %v853
  %1199 = vmatprep.subr.mxu0 0.0
  %1200 = vmatpush1.msra.mxu0 %v854
  %1201 = vmatprep.subr.mxu0 0.0
  %1202 = vmatpush1.msra.mxu0 %v855
  %1203 = vmatprep.subr.mxu0 0.0
  %1204 = vmatpush1.msra.mxu0 %v856
  %1205 = vmatprep.subr.mxu0 0.0
  %1206 = vmatpush1.msra.mxu0 %v857
  %1207 = vmatprep.subr.mxu0 0.0
  %1208 = vmatpush1.msra.mxu0 %v858
  %1209 = vmatprep.subr.mxu0 0.0
  %1210 = vmatpush1.msra.mxu0 %v859
  %1211 = vmatprep.subr.mxu0 0.0
  %1212 = vmatpush1.msra.mxu0 %v860
  %1213 = vmatprep.subr.mxu0 0.0
  %1214 = vmatpush1.msra.mxu0 %v861
  %1215 = vmatprep.subr.mxu0 0.0
  %1216 = vmatpush1.msra.mxu0 %v862
  %1217 = vmatprep.subr.mxu0 0.0
  %1218 = vmatpush1.msra.mxu0 %v863
  %1219 = vmatprep.subr.mxu0 0.0
  %1220 = vmatpush1.msra.mxu0 %v864
  %1221 = vmatprep.subr.mxu0 0.0
  %1222 = vmatpush1.msra.mxu0 %v865
  %1223 = vmatprep.mubr.f32.mxu0 %v704
  %1224 = vmatmul.mubr.f32.gmra.mrb[0].mxu0 %v703
  %v1225 = vpop.f32.mrb[0].mxu0
  %v1226 = vadd.f32 %v1156, %v1225
  %v1227 = vpop.f32.mrb[0].mxu0
  %1228 = vdwg.mxu0
  %1229 = vmatprep.subr.mxu0 0.0
  %1230 = vmatpush1.msra.mxu0 %v866
  %1231 = vmatprep.subr.mxu0 0.0
  %1232 = vmatpush1.msra.mxu0 %v867
  %1233 = vmatprep.subr.mxu0 0.0
  %1234 = vmatpush1.msra.mxu0 0.0
  %1235 = vmatprep.subr.mxu0 0.0
  %1236 = vmatpush1.msra.mxu0 0.0
  %1237 = vmatprep.subr.mxu0 0.0
  %1238 = vmatpush1.msra.mxu0 0.0
  %1239 = vmatprep.subr.mxu0 0.0
  %1240 = vmatpush1.msra.mxu0 0.0
  %1241 = vmatprep.subr.mxu0 0.0
  %1242 = vmatpush1.msra.mxu0 0.0
  %1243 = vmatprep.subr.mxu0 0.0
  %1244 = vmatpush1.msra.mxu0 0.0
  %1245 = vmatprep.subr.mxu0 0.0
  %1246 = vmatpush1.msra.mxu0 0.0
  %1247 = vmatprep.subr.mxu0 0.0
  %1248 = vmatpush1.msra.mxu0 0.0
  %1249 = vmatprep.subr.mxu0 0.0
  %1250 = vmatpush1.msra.mxu0 0.0
  %1251 = vmatprep.subr.mxu0 0.0
  %1252 = vmatpush1.msra.mxu0 0.0
  %1253 = vmatprep.subr.mxu0 0.0
  %1254 = vmatpush1.msra.mxu0 0.0
  %1255 = vmatprep.subr.mxu0 0.0
  %1256 = vmatpush1.msra.mxu0 0.0
  %1257 = vmatprep.subr.mxu0 0.0
  %1258 = vmatpush1.msra.mxu0 0.0
  %1259 = vmatprep.subr.mxu0 0.0
  %1260 = vmatpush1.msra.mxu0 0.0
  %1261 = vmatprep.subr.mxu0 0.0
  %1262 = vmatpush1.msra.mxu0 0.0
  %1263 = vmatprep.subr.mxu0 0.0
  %1264 = vmatpush1.msra.mxu0 0.0
  %1265 = vmatprep.subr.mxu0 0.0
  %1266 = vmatpush1.msra.mxu0 0.0
  %1267 = vmatprep.subr.mxu0 0.0
  %1268 = vmatpush1.msra.mxu0 0.0
  %1269 = vmatprep.subr.mxu0 0.0
  %1270 = vmatpush1.msra.mxu0 0.0
  %1271 = vmatprep.subr.mxu0 0.0
  %1272 = vmatpush1.msra.mxu0 0.0
  %1273 = vmatprep.subr.mxu0 0.0
  %1274 = vmatpush1.msra.mxu0 0.0
  %1275 = vmatprep.subr.mxu0 0.0
  %1276 = vmatpush1.msra.mxu0 0.0
  %1277 = vmatprep.subr.mxu0 0.0
  %1278 = vmatpush1.msra.mxu0 0.0
  %1279 = vmatprep.subr.mxu0 0.0
  %1280 = vmatpush1.msra.mxu0 0.0
  %1281 = vmatprep.subr.mxu0 0.0
  %1282 = vmatpush1.msra.mxu0 0.0
  %1283 = vmatprep.subr.mxu0 0.0
  %1284 = vmatpush1.msra.mxu0 0.0
  %1285 = vmatprep.subr.mxu0 0.0
  %1286 = vmatpush1.msra.mxu0 0.0
  %1287 = vmatprep.subr.mxu0 0.0
  %1288 = vmatpush1.msra.mxu0 0.0
  %1289 = vmatprep.subr.mxu0 0.0
  %1290 = vmatpush1.msra.mxu0 0.0
  %1291 = vmatprep.subr.mxu0 0.0
  %1292 = vmatpush1.msra.mxu0 0.0
  %1293 = vmatprep.mubr.f32.mxu0 0.0
  %1294 = vmatmul.mubr.f32.gmra.mrb[0].mxu0 %v877
  %v1295 = vpop.f32.mrb[0].mxu0
  %v1296 = vadd.f32 %v1226, %v1295
  %v1297 = vpop.f32.mrb[0].mxu0
  %1298 = vdwg.mxu0
  %v1299 = vld [vmem:[%s5] sm:$0xff]
  %v1300 = vld [vmem:[%s5 + $0x8] sm:$0xff]
  %v1301 = vld [vmem:[%s5 + $0x10] sm:$0xff]
  %v1302 = vld [vmem:[%s5 + $0x18] sm:$0xff]
  %v1303 = vld [vmem:[%s5 + $0x20] sm:$0xff]
  %v1304 = vld [vmem:[%s5 + $0x28] sm:$0xff]
  %v1305 = vld [vmem:[%s5 + $0x30] sm:$0xff]
  %v1306 = vld [vmem:[%s5 + $0x38] sm:$0xff]
  %v1307 = vld [vmem:[%s5 + $0x40] sm:$0xff]
  %v1308 = vld [vmem:[%s5 + $0x48] sm:$0xff]
  %v1309 = vld [vmem:[%s5 + $0x50] sm:$0xff]
  %v1310 = vld [vmem:[%s5 + $0x58] sm:$0xff]
  %v1311 = vld [vmem:[%s5 + $0x60] sm:$0xff]
  %v1312 = vld [vmem:[%s5 + $0x68] sm:$0xff]
  %v1313 = vld [vmem:[%s5 + $0x70] sm:$0xff]
  %v1314 = vld [vmem:[%s5 + $0x78] sm:$0xff]
  %v1315 = vld [vmem:[%s6] sm:$0x1]
  %v1317 = vlaneseq
  %v1318 = vshrl.u32 %v1317, 7
  %v1319 = vsub.s32 0, %v1318
  %v1320 = vrot.slane %v1315, %v1319
  %1322 = vmatprep.subr.mxu0 0.0
  %1323 = vmatpush1.msra.mxu0 %v1299
  %1324 = vmatprep.subr.mxu0 0.0
  %1325 = vmatpush1.msra.mxu0 %v1300
  %1326 = vmatprep.subr.mxu0 0.0
  %1327 = vmatpush1.msra.mxu0 %v1301
  %1328 = vmatprep.subr.mxu0 0.0
  %1329 = vmatpush1.msra.mxu0 %v1302
  %1330 = vmatprep.subr.mxu0 0.0
  %1331 = vmatpush1.msra.mxu0 %v1303
  %1332 = vmatprep.subr.mxu0 0.0
  %1333 = vmatpush1.msra.mxu0 %v1304
  %1334 = vmatprep.subr.mxu0 0.0
  %1335 = vmatpush1.msra.mxu0 %v1305
  %1336 = vmatprep.subr.mxu0 0.0
  %1337 = vmatpush1.msra.mxu0 %v1306
  %1338 = vmatprep.subr.mxu0 0.0
  %1339 = vmatpush1.msra.mxu0 %v1307
  %1340 = vmatprep.subr.mxu0 0.0
  %1341 = vmatpush1.msra.mxu0 %v1308
  %1342 = vmatprep.subr.mxu0 0.0
  %1343 = vmatpush1.msra.mxu0 %v1309
  %1344 = vmatprep.subr.mxu0 0.0
  %1345 = vmatpush1.msra.mxu0 %v1310
  %1346 = vmatprep.subr.mxu0 0.0
  %1347 = vmatpush1.msra.mxu0 %v1311
  %1348 = vmatprep.subr.mxu0 0.0
  %1349 = vmatpush1.msra.mxu0 %v1312
  %1350 = vmatprep.subr.mxu0 0.0
  %1351 = vmatpush1.msra.mxu0 %v1313
  %1352 = vmatprep.subr.mxu0 0.0
  %1353 = vmatpush1.msra.mxu0 %v1314
  %1354 = vmatprep.subr.mxu0 0.0
  %1355 = vmatpush1.msra.mxu0 0.0
  %1356 = vmatprep.subr.mxu0 0.0
  %1357 = vmatpush1.msra.mxu0 0.0
  %1358 = vmatprep.subr.mxu0 0.0
  %1359 = vmatpush1.msra.mxu0 0.0
  %1360 = vmatprep.subr.mxu0 0.0
  %1361 = vmatpush1.msra.mxu0 0.0
  %1362 = vmatprep.subr.mxu0 0.0
  %1363 = vmatpush1.msra.mxu0 0.0
  %1364 = vmatprep.subr.mxu0 0.0
  %1365 = vmatpush1.msra.mxu0 0.0
  %1366 = vmatprep.subr.mxu0 0.0
  %1367 = vmatpush1.msra.mxu0 0.0
  %1368 = vmatprep.subr.mxu0 0.0
  %1369 = vmatpush1.msra.mxu0 0.0
  %1370 = vmatprep.subr.mxu0 0.0
  %1371 = vmatpush1.msra.mxu0 0.0
  %1372 = vmatprep.subr.mxu0 0.0
  %1373 = vmatpush1.msra.mxu0 0.0
  %1374 = vmatprep.subr.mxu0 0.0
  %1375 = vmatpush1.msra.mxu0 0.0
  %1376 = vmatprep.subr.mxu0 0.0
  %1377 = vmatpush1.msra.mxu0 0.0
  %1378 = vmatprep.subr.mxu0 0.0
  %1379 = vmatpush1.msra.mxu0 0.0
  %1380 = vmatprep.subr.mxu0 0.0
  %1381 = vmatpush1.msra.mxu0 0.0
  %1382 = vmatprep.subr.mxu0 0.0
  %1383 = vmatpush1.msra.mxu0 0.0
  %1384 = vmatprep.subr.mxu0 0.0
  %1385 = vmatpush1.msra.mxu0 0.0
  %1386 = vmatprep.mubr.f32.mxu0 0.0
  %1387 = vmatmul.mubr.f32.gmra.mrb[0].mxu0 %v1296
  %v1388 = vpop.f32.mrb[0].mxu0
  %v1389 = vadd.f32 %v1320, %v1388
  %v1390 = vpop.f32.mrb[0].mxu0
  %1391 = vdwg.mxu0
  %v1392 = vld [vmem:[%s7] sm:$0x1]
  %v1394 = vlaneseq
  %v1395 = vshrl.u32 %v1394, 7
  %v1396 = vsub.s32 0, %v1395
  %v1397 = vrot.slane %v1392, %v1396
  %v1399 = vmul.f32 %v1389, %v1397
  %vm1400 = vcmask 1041408
  %v1401 = vsel %vm1400, %v1399, 0.0
  %1402 = vadd.xlane.f32.xlu0 %v1401
  %v1403 = vpop.xlane.xlu0 %1402
  %v1404 = vld [vmem:[#allocation2] sm:$0x1]
  %v1406 = vlaneseq
  %v1407 = vshrl.u32 %v1406, 7
  %v1408 = vsub.s32 0, %v1407
  %v1409 = vrot.slane %v1404, %v1408
  %v1411 = vadd.f32 %v1403, %v1409
  %vm1412 = vcmask 1024
  %1413 = vst.msk [vmem:[%s9] sm:$0x3] %vm1412, %v1411
  // Predicated region
  $region38: #{model_forward.1} parent=0 // pred_check
    _
  $region39: #{model_forward.1} parent=0 // pred_check_branch
    %1415 = sbr.rel (0) target = $region41
  $region40: #{model_forward.1} parent=0 // pred_region
    _
  $region41: #{model_forward.1} parent=0 // pred_fallthru
    _
  // Predicated region
  $region42: #{model_forward.1} parent=0 // pred_check
    _
  $region43: #{model_forward.1} parent=0 // pred_check_branch
    %1417 = sbr.rel (0) target = $region45
  $region44: #{model_forward.1} parent=0 // pred_region
    _
  $region45: #{model_forward.1} parent=0 // pred_fallthru
    _

</llo_original>
